<compile_context>
chip_gen: v7x
topology: tpu7x:2x2x1
jax: 0.10.0
libtpu: 0.0.40
codegen_flags: <defaults>
</compile_context>

<pallas_src>
import functools

import numpy as np
import jax
import jax.numpy as jnp
from jax.experimental import pallas as pl
from jax.experimental.pallas import tpu as pltpu

LRELU_SLOPE = 0.01   # nn.LeakyReLU() default
BN_EPS = 1e-5        # nn.BatchNorm2d default


# ---------------------------------------------------------------------------
# Kernels
# ---------------------------------------------------------------------------
def _conv1_fused_kernel(x_ref, w_ref, scale_ref, bias_ref, add_ref, o_ref,
                        *, taps, ho):
    """conv1 (k3 s2 p1) + BN + LeakyReLU + fused channel concat, one image.

    x_ref:     (1, stride, rows_p, Kp)  bf16  phase-split, K-padded input
    w_ref:     (kh*Kp, cols)            bf16  tap-stacked banded weights
    scale_ref: (1, cols)                f32   BN scale per lane (0 on pad/rem lanes)
    bias_ref:  (1, cols)                f32   BN bias  per lane (0 on pad/rem lanes)
    add_ref:   (1, ho, cols)            bf16  rem pre-placed in its lanes, 0 elsewhere
    o_ref:     (1, ho+2, cols)          bf16  spatially padded concat output
                                              (this IS conv2's input buffer)
    """
    # Lane-aligned (Kp = multiple of 128) concat of the kh tap slices -> one
    # MXU matmul with the taps stacked along K.
    slab = jnp.concatenate(
        [x_ref[0, p, q:q + ho, :] for (p, q) in taps], axis=-1)   # (ho, kh*Kp)
    acc = jnp.dot(slab, w_ref[...], preferred_element_type=jnp.float32)
    y = acc * scale_ref[...] + bias_ref[...]
    y = jnp.where(y >= 0, y, LRELU_SLOPE * y)
    # Structural invariant (asserted host-side in prepare_conv2x): pad-group
    # and rem lanes have zero weight columns, zero scale and zero bias, so y is
    # exactly 0 there; adding `add` therefore realizes the channel concat and
    # keeps the W-padding ring at 0.
    y = y + add_ref[0].astype(jnp.float32)

    cols = o_ref.shape[2]
    zero_row = jnp.zeros((1, cols), o_ref.dtype)
    o_ref[0, 0:1, :] = zero_row                    # top H-padding row for conv2
    o_ref[0, ho + 1:ho + 2, :] = zero_row          # bottom H-padding row for conv2
    o_ref[0, 1:ho + 1, :] = y.astype(o_ref.dtype)


def _conv2_kernel(x_ref, w_ref, scale_ref, bias_ref, o_ref, *, kh, ho):
    """conv2 (k3 s1 p1) + BN + LeakyReLU on the pre-padded concat buffer.

    x_ref:     (1, ho+2, K2)   bf16  conv1's fused output (already padded)
    w_ref:     (kh, K2, cols)  bf16  banded weights per kh tap
    scale_ref: (1, cols)       f32
    bias_ref:  (1, cols)       f32
    o_ref:     (1, ho, cols)
    """
    acc = None
    for q in range(kh):                            # static unroll: kh MXU matmuls
        part = jnp.dot(x_ref[0, q:q + ho, :], w_ref[q],
                       preferred_element_type=jnp.float32)
        acc = part if acc is None else acc + part
    y = acc * scale_ref[...] + bias_ref[...]
    y = jnp.where(y >= 0, y, LRELU_SLOPE * y)
    o_ref[0] = y.astype(o_ref.dtype)


# ---------------------------------------------------------------------------
# Host-side, ONE-TIME preparation (numpy; runs outside jit)
# ---------------------------------------------------------------------------
def _fold_bn_scale_bias(gamma, beta, rmean, rvar):
    inv_std = 1.0 / np.sqrt(rvar + BN_EPS)
    scale = gamma * inv_std
    bias = beta - rmean * scale
    return scale, bias


def prepare_conv2x(params, x_shape, rem_shape):
    """Build all static kernel operands once (numpy), return (geom, prep)."""
    w1 = np.asarray(params["w1"], np.float32)          # (c1, cin, 3, 3)
    w2 = np.asarray(params["w2"], np.float32)          # (cout2, c2, 3, 3)
    c1, cin, kh, kw = w1.shape
    c2 = 2 * c1                                        # concat=True, keep_concat=True
    cout2, cin2 = w2.shape[0], w2.shape[1]
    assert cin2 == c2, "conv2 expects concat(conv1_out, rem) channels"

    n, cin_x, H, W = x_shape
    assert cin_x == cin
    Hr, Wr = rem_shape[2], rem_shape[3]

    # ------------------ conv1 geometry (k=3, s=2, p=1) ------------------
    stride1, pad1 = 2, 1
    h1 = (H + 2 * pad1 - kh) // stride1 + 1
    w1o = (W + 2 * pad1 - kw) // stride1 + 1
    hp1, wp1 = H + 2 * pad1, W + 2 * pad1
    rows_p = max(-(-hp1 // stride1), (kh - 1) // stride1 + h1)
    k1 = wp1 * cin
    k1p = -(-k1 // 128) * 128                          # pad K to a lane multiple
    cols1 = (w1o + 2) * c2                             # conv2-ready padded-W layout
    taps = tuple((di % stride1, di // stride1) for di in range(kh))

    scale1, bias1 = _fold_bn_scale_bias(np.asarray(params["g1"], np.float32),
                                        np.asarray(params["b1"], np.float32),
                                        np.asarray(params["rm1"], np.float32),
                                        np.asarray(params["rv1"], np.float32))

    # Tap-stacked banded weights: rows = kh blocks of k1p (kw taps + W-stride
    # baked into the band), cols = (w1o+2)*c2 padded/concat output layout.
    w1b = np.zeros((kh * k1p, cols1), np.float32)
    s1row = np.zeros((1, cols1), np.float32)
    b1row = np.zeros((1, cols1), np.float32)
    for di in range(kh):
        for dj in range(kw):
            blk = w1[:, :, di, dj].T                   # (cin, c1)
            for ow in range(w1o):
                iw = ow * stride1 + dj                 # padded input column
                r0 = di * k1p + iw * cin
                c0 = (ow + 1) * c2                     # +1 = left W-padding group
                w1b[r0:r0 + cin, c0:c0 + c1] = blk
    for ow in range(w1o):
        c0 = (ow + 1) * c2
        s1row[0, c0:c0 + c1] = scale1
        b1row[0, c0:c0 + c1] = bias1
    # Guard the fused-concat invariant: pad groups and rem lanes must be
    # structurally zero (weights, scale and bias).
    w1b_g = w1b.reshape(kh * k1p, w1o + 2, c2)
    s1_g = s1row.reshape(1, w1o + 2, c2)
    b1_g = b1row.reshape(1, w1o + 2, c2)
    assert np.all(w1b_g[:, 0, :] == 0) and np.all(w1b_g[:, -1, :] == 0)
    assert np.all(w1b_g[:, :, c1:] == 0)
    assert np.all(s1_g[:, :, c1:] == 0) and np.all(b1_g[:, :, c1:] == 0)
    assert np.all(s1_g[:, [0, -1], :] == 0) and np.all(b1_g[:, [0, -1], :] == 0)

    # ------------- conv2 geometry (k=3, s=1, p=1) on (Hr, Wr, c2) -------------
    h2, w2o = Hr, Wr
    k2 = (Wr + 2) * c2
    cols2 = w2o * cout2

    scale2, bias2 = _fold_bn_scale_bias(np.asarray(params["g2"], np.float32),
                                        np.asarray(params["b2"], np.float32),
                                        np.asarray(params["rm2"], np.float32),
                                        np.asarray(params["rv2"], np.float32))
    w2b = np.zeros((kh, k2, cols2), np.float32)
    for di in range(kh):
        for dj in range(kw):
            blk = w2[:, :, di, dj].T                   # (c2, cout2)
            for ow in range(w2o):
                iw = ow + dj                           # padded input column (s=1)
                w2b[di, iw * c2:(iw + 1) * c2,
                    ow * cout2:(ow + 1) * cout2] = blk
    s2row = np.tile(scale2, (w2o,)).reshape(1, cols2)
    b2row = np.tile(bias2, (w2o,)).reshape(1, cols2)

    geom = dict(N=n, cin=cin, c1=c1, c2=c2, cout2=cout2, kh=kh, kw=kw,
                stride1=stride1, pad1=pad1, h1=h1, w1o=w1o, rows_p=rows_p,
                k1p=k1p, cols1=cols1, taps=taps,
                Hr=Hr, Wr=Wr, h2=h2, w2o=w2o, k2=k2, cols2=cols2)
    prep = dict(w1b=jnp.asarray(w1b, jnp.bfloat16),
                s1row=jnp.asarray(s1row, jnp.float32),
                b1row=jnp.asarray(b1row, jnp.float32),
                w2b=jnp.asarray(w2b, jnp.bfloat16),
                s2row=jnp.asarray(s2row, jnp.float32),
                b2row=jnp.asarray(b2row, jnp.float32))
    return geom, prep


# ---------------------------------------------------------------------------
# Cheap (single-pass) traced input prep for conv1
# ---------------------------------------------------------------------------
def _phase_split_conv1_input(x_nhwc, *, stride, padding, rows_p, k1p):
    n, h, w, c = x_nhwc.shape
    xp = jnp.pad(x_nhwc, ((0, 0), (padding, padding), (padding, padding), (0, 0)))
    hp, wp = h + 2 * padding, w + 2 * padding
    if rows_p * stride > hp:
        xp = jnp.pad(xp, ((0, 0), (0, rows_p * stride - hp), (0, 0), (0, 0)))
    ph = jnp.stack([xp[:, p::stride] for p in range(stride)], axis=1)
    ph = ph.reshape(n, stride, rows_p, wp * c)
    if k1p > wp * c:
        ph = jnp.pad(ph, ((0, 0), (0, 0), (0, 0), (0, k1p - wp * c)))
    return ph


# ---------------------------------------------------------------------------
# Conv2x forward (NCHW in / NCHW out, like the PyTorch module)
# ---------------------------------------------------------------------------
def conv2x_forward(geom, prep, x_nchw, rem_nchw, out_dtype=jnp.float32):
    g = geom
    N, c1, c2, cout2, kh = g["N"], g["c1"], g["c2"], g["cout2"], g["kh"]
    h1, w1o, rows_p, k1p, cols1 = g["h1"], g["w1o"], g["rows_p"], g["k1p"], g["cols1"]
    h2, w2o, k2, cols2 = g["h2"], g["w2o"], g["k2"], g["cols2"]

    x = jnp.transpose(x_nchw, (0, 2, 3, 1)).astype(jnp.bfloat16)   # NHWC bf16
    rem = jnp.transpose(rem_nchw, (0, 2, 3, 1))                    # NHWC f32

    fused_concat = (h1, w1o) == (g["Hr"], g["Wr"])

    x_ph = _phase_split_conv1_input(x, stride=g["stride1"], padding=g["pad1"],
                                    rows_p=rows_p, k1p=k1p)

    if fused_concat:
        # rem pre-placed (bf16) into its channel lanes of conv1's output layout.
        add4 = jnp.zeros((N, h1, w1o + 2, c2), jnp.bfloat16)
        add4 = add4.at[:, :, 1:1 + w1o, c1:].set(rem.astype(jnp.bfloat16))
        add = add4.reshape(N, h1, cols1)
    else:
        add = jnp.zeros((N, h1, cols1), jnp.bfloat16)

    conv1_call = pl.pallas_call(
        functools.partial(_conv1_fused_kernel, taps=g["taps"], ho=h1),
        out_shape=jax.ShapeDtypeStruct((N, h1 + 2, cols1), jnp.bfloat16),
        grid=(N,),
        in_specs=[
            pl.BlockSpec((1, g["stride1"], rows_p, k1p), lambda i: (i, 0, 0, 0)),
            pl.BlockSpec((kh * k1p, cols1), lambda i: (0, 0)),
            pl.BlockSpec((1, cols1), lambda i: (0, 0)),
            pl.BlockSpec((1, cols1), lambda i: (0, 0)),
            pl.BlockSpec((1, h1, cols1), lambda i: (i, 0, 0)),
        ],
        out_specs=pl.BlockSpec((1, h1 + 2, cols1), lambda i: (i, 0, 0)),
        compiler_params=pltpu.CompilerParams(
            dimension_semantics=("parallel",)),
    )
    buf = conv1_call(x_ph, prep["w1b"], prep["s1row"], prep["b1row"], add)

    if fused_concat:
        buf2 = buf                      # already conv2's padded input layout
    else:
        # TODO(synk): fuse nearest-interpolate + concat into the kernel for
        # mismatched sizes too; host fallback keeps module semantics.
        Hr, Wr = g["Hr"], g["Wr"]
        y1 = buf.reshape(N, h1 + 2, w1o + 2, c2)[:, 1:1 + h1, 1:1 + w1o, :c1]
        y1 = y1.astype(jnp.float32)
        hi = (jnp.arange(Hr) * h1) // Hr
        wi = (jnp.arange(Wr) * w1o) // Wr
        y1 = y1[:, hi[:, None], wi[None, :], :]
        cat = jnp.concatenate([y1, rem], axis=-1).astype(jnp.bfloat16)
        catp = jnp.pad(cat, ((0, 0), (1, 1), (1, 1), (0, 0)))
        buf2 = catp.reshape(N, Hr + 2, (Wr + 2) * c2)

    conv2_call = pl.pallas_call(
        functools.partial(_conv2_kernel, kh=kh, ho=h2),
        out_shape=jax.ShapeDtypeStruct((N, h2, cols2), out_dtype),
        grid=(N,),
        in_specs=[
            pl.BlockSpec((1, h2 + 2, k2), lambda i: (i, 0, 0)),
            pl.BlockSpec((kh, k2, cols2), lambda i: (0, 0, 0)),
            pl.BlockSpec((1, cols2), lambda i: (0, 0)),
            pl.BlockSpec((1, cols2), lambda i: (0, 0)),
        ],
        out_specs=pl.BlockSpec((1, h2, cols2), lambda i: (i, 0, 0)),
        compiler_params=pltpu.CompilerParams(
            dimension_semantics=("parallel",)),
    )
    out = conv2_call(buf2, prep["w2b"], prep["s2row"], prep["b2row"])

    out = out.reshape(N, h2, w2o, cout2)
    return jnp.transpose(out, (0, 3, 1, 2))            # -> NCHW


# ---------------------------------------------------------------------------
# Pure-JAX (XLA conv, f32) reference used to verify the Pallas path
# ---------------------------------------------------------------------------
def _ref_basicconv(x_nchw, w, g, b, rm, rv, stride, padding):
    y = jax.lax.conv_general_dilated(
        x_nchw, w, (stride, stride), [(padding, padding), (padding, padding)],
        dimension_numbers=("NCHW", "OIHW", "NCHW"))
    scale = g / jnp.sqrt(rv + BN_EPS)
    shift = b - rm * scale
    y = y * scale[None, :, None, None] + shift[None, :, None, None]
    return jnp.where(y >= 0, y, LRELU_SLOPE * y)


def ref_conv2x(params, x_nchw, rem_nchw):
    y = _ref_basicconv(x_nchw, params["w1"], params["g1"], params["b1"],
                       params["rm1"], params["rv1"], 2, 1)
    if y.shape[-2:] != rem_nchw.shape[-2:]:
        ht, wt = rem_nchw.shape[-2], rem_nchw.shape[-1]
        hi = (jnp.arange(ht) * y.shape[-2]) // ht
        wi = (jnp.arange(wt) * y.shape[-1]) // wt
        y = y[:, :, hi[:, None], wi[None, :]]
    y = jnp.concatenate([y, rem_nchw], axis=1)
    return _ref_basicconv(y, params["w2"], params["g2"], params["b2"],
                          params["rm2"], params["rv2"], 1, 1)


# ---------------------------------------------------------------------------
if __name__ == "__main__":
    key = jax.random.PRNGKey(0)
    ks = jax.random.split(key, 12)

    IN_CH, OUT_CH = 4, 8
    N, H, W = 2, 16, 16
    C2 = OUT_CH * 2        # concat=True, keep_concat=True

    # Conv2x(in=4, out=8): conv1 (8,4,3,3) s2 p1; conv2 (16,16,3,3) s1 p1.
    params = {
        "w1": 0.1 * jax.random.normal(ks[0], (OUT_CH, IN_CH, 3, 3), jnp.float32),
        "g1": 0.5 + jax.random.uniform(ks[1], (OUT_CH,), jnp.float32),
        "b1": 0.1 * jax.random.normal(ks[2], (OUT_CH,), jnp.float32),
        "rm1": 0.1 * jax.random.normal(ks[3], (OUT_CH,), jnp.float32),
        "rv1": 0.5 + jax.random.uniform(ks[4], (OUT_CH,), jnp.float32),
        "w2": 0.1 * jax.random.normal(ks[5], (C2, C2, 3, 3), jnp.float32),
        "g2": 0.5 + jax.random.uniform(ks[6], (C2,), jnp.float32),
        "b2": 0.1 * jax.random.normal(ks[7], (C2,), jnp.float32),
        "rm2": 0.1 * jax.random.normal(ks[8], (C2,), jnp.float32),
        "rv2": 0.5 + jax.random.uniform(ks[9], (C2,), jnp.float32),
    }

    x = jax.random.normal(ks[10], (N, IN_CH, H, W), jnp.float32)          # NCHW
    rem = jax.random.normal(ks[11], (N, OUT_CH, H // 2, W // 2), jnp.float32)

    # Banded weights / BN rows are built ONCE, outside jit.
    geom, prep = prepare_conv2x(params, x.shape, rem.shape)
    fwd = jax.jit(functools.partial(conv2x_forward, geom))

    out = jax.block_until_ready(fwd(prep, x, rem))

    ref = jax.block_until_ready(ref_conv2x(params, x, rem))
    assert out.shape == ref.shape == (N, C2, H // 2, W // 2), (out.shape, ref.shape)
    # bf16 MXU operands / bf16 intermediate buffer -> relaxed tolerance vs the
    # f32 XLA reference.
    abs_err = jnp.abs(out - ref)
    max_err = float(jnp.max(abs_err))
    mean_err = float(jnp.mean(abs_err))
    assert max_err < 1e-1 and mean_err < 1e-2, (max_err, mean_err)

    print("KERNEL_OK")
</pallas_src>

<mosaic_0001>
module attributes {stable_mosaic.version = 11 : i64} {
  func.func @_conv1_fused_kernel(%arg0: i32, %arg1: memref<1x2x9x128xbf16, #tpu.memory_space<vmem>>, %arg2: memref<384x160xbf16, #tpu.memory_space<vmem>>, %arg3: memref<1x160xf32, #tpu.memory_space<vmem>>, %arg4: memref<1x160xf32, #tpu.memory_space<vmem>>, %arg5: memref<1x8x160xbf16, #tpu.memory_space<vmem>>, %arg6: memref<1x10x160xbf16, #tpu.memory_space<vmem>>) attributes {dimension_semantics = [#tpu.dimension_semantics<parallel>], iteration_bounds = array<i64: 2>, scalar_prefetch = 0 : i64, scratch_operands = 0 : i64, tpu.core_type = #tpu.core_type<tc>, window_params = [{transform_indices = @transform_0, window_bounds = array<i64: 1, 2, 9, 128>}, {pipeline_mode = #tpu.pipeline_mode<synchronous>, transform_indices = @transform_1, window_bounds = array<i64: 384, 160>}, {pipeline_mode = #tpu.pipeline_mode<synchronous>, transform_indices = @transform_2, window_bounds = array<i64: 1, 160>}, {pipeline_mode = #tpu.pipeline_mode<synchronous>, transform_indices = @transform_3, window_bounds = array<i64: 1, 160>}, {transform_indices = @transform_4, window_bounds = array<i64: 1, 8, 160>}, {transform_indices = @transform_5, window_bounds = array<i64: 1, 10, 160>}]} {
    %c0 = arith.constant 0 : index
    %c0_0 = arith.constant 0 : index
    %c0_1 = arith.constant 0 : index
    %c0_2 = arith.constant 0 : index
    %0 = vector.load %arg1[%c0, %c0_0, %c0_1, %c0_2] : memref<1x2x9x128xbf16, #tpu.memory_space<vmem>>, vector<1x1x8x128xbf16>
    %1 = vector.shape_cast %0 : vector<1x1x8x128xbf16> to vector<8x128xbf16>
    %c0_3 = arith.constant 0 : index
    %c1 = arith.constant 1 : index
    %c0_4 = arith.constant 0 : index
    %c0_5 = arith.constant 0 : index
    %2 = vector.load %arg1[%c0_3, %c1, %c0_4, %c0_5] : memref<1x2x9x128xbf16, #tpu.memory_space<vmem>>, vector<1x1x8x128xbf16>
    %3 = vector.shape_cast %2 : vector<1x1x8x128xbf16> to vector<8x128xbf16>
    %c0_6 = arith.constant 0 : index
    %c0_7 = arith.constant 0 : index
    %c1_8 = arith.constant 1 : index
    %c0_9 = arith.constant 0 : index
    %4 = vector.load %arg1[%c0_6, %c0_7, %c1_8, %c0_9] : memref<1x2x9x128xbf16, #tpu.memory_space<vmem>>, vector<1x1x8x128xbf16>
    %5 = vector.shape_cast %4 : vector<1x1x8x128xbf16> to vector<8x128xbf16>
    %6 = tpu.concatenate %1, %3, %5 in 1 : vector<8x128xbf16>, vector<8x128xbf16>, vector<8x128xbf16> -> vector<8x384xbf16>
    %c0_10 = arith.constant 0 : index
    %c0_11 = arith.constant 0 : index
    %7 = vector.load %arg2[%c0_10, %c0_11] : memref<384x160xbf16, #tpu.memory_space<vmem>>, vector<384x160xbf16>
    %cst = arith.constant dense<0.000000e+00> : vector<8x160xf32>
    %8 = tpu.matmul %6, %7, %cst {dimension_numbers = #tpu.dot_dimension_numbers<[1], [0], [0], [1], [0, 0, 1, 1], [], []>} : vector<8x384xbf16>, vector<384x160xbf16>, vector<8x160xf32> -> vector<8x160xf32>
    %c0_12 = arith.constant 0 : index
    %c0_13 = arith.constant 0 : index
    %9 = vector.load %arg3[%c0_12, %c0_13] : memref<1x160xf32, #tpu.memory_space<vmem>>, vector<1x160xf32>
    %10 = vector.broadcast %9 : vector<1x160xf32> to vector<8x160xf32>
    %11 = arith.mulf %8, %10 : vector<8x160xf32>
    %c0_14 = arith.constant 0 : index
    %c0_15 = arith.constant 0 : index
    %12 = vector.load %arg4[%c0_14, %c0_15] : memref<1x160xf32, #tpu.memory_space<vmem>>, vector<1x160xf32>
    %13 = vector.broadcast %12 : vector<1x160xf32> to vector<8x160xf32>
    %14 = arith.addf %11, %13 : vector<8x160xf32>
    %cst_16 = arith.constant 0.000000e+00 : f32
    %15 = vector.broadcast %cst_16 : f32 to vector<8x160xf32>
    %16 = arith.cmpf oge, %14, %15 : vector<8x160xf32>
    %cst_17 = arith.constant 0.00999999977 : f32
    %17 = vector.broadcast %cst_17 : f32 to vector<8x160xf32>
    %18 = arith.mulf %17, %14 : vector<8x160xf32>
    %19 = arith.select %16, %14, %18 : vector<8x160xi1>, vector<8x160xf32>
    %c0_18 = arith.constant 0 : index
    %c0_19 = arith.constant 0 : index
    %c0_20 = arith.constant 0 : index
    %20 = vector.load %arg5[%c0_18, %c0_19, %c0_20] : memref<1x8x160xbf16, #tpu.memory_space<vmem>>, vector<1x8x160xbf16>
    %21 = vector.shape_cast %20 : vector<1x8x160xbf16> to vector<8x160xbf16>
    %22 = arith.extf %21 : vector<8x160xbf16> to vector<8x160xf32>
    %23 = arith.addf %19, %22 : vector<8x160xf32>
    %cst_21 = arith.constant 0.000000e+00 : bf16
    %24 = vector.broadcast %cst_21 : bf16 to vector<1x160xbf16>
    %c0_22 = arith.constant 0 : index
    %c0_23 = arith.constant 0 : index
    %c0_24 = arith.constant 0 : index
    %25 = vector.load %arg6[%c0_22, %c0_23, %c0_24] : memref<1x10x160xbf16, #tpu.memory_space<vmem>>, vector<1x1x160xbf16>
    %26 = vector.shape_cast %25 : vector<1x1x160xbf16> to vector<1x160xbf16>
    %27 = vector.shape_cast %24 : vector<1x160xbf16> to vector<1x1x160xbf16>
    tpu.vector_store %arg6[%c0_22, %c0_23, %c0_24], %27 {strides = array<i32>} : memref<1x10x160xbf16, #tpu.memory_space<vmem>>, vector<1x1x160xbf16>,
    %c0_25 = arith.constant 0 : index
    %c9 = arith.constant 9 : index
    %c0_26 = arith.constant 0 : index
    %28 = vector.load %arg6[%c0_25, %c9, %c0_26] : memref<1x10x160xbf16, #tpu.memory_space<vmem>>, vector<1x1x160xbf16>
    %29 = vector.shape_cast %28 : vector<1x1x160xbf16> to vector<1x160xbf16>
    %30 = vector.shape_cast %24 : vector<1x160xbf16> to vector<1x1x160xbf16>
    tpu.vector_store %arg6[%c0_25, %c9, %c0_26], %30 {strides = array<i32>} : memref<1x10x160xbf16, #tpu.memory_space<vmem>>, vector<1x1x160xbf16>,
    %31 = arith.truncf %23 : vector<8x160xf32> to vector<8x160xbf16>
    %c0_27 = arith.constant 0 : index
    %c1_28 = arith.constant 1 : index
    %c0_29 = arith.constant 0 : index
    %32 = vector.load %arg6[%c0_27, %c1_28, %c0_29] : memref<1x10x160xbf16, #tpu.memory_space<vmem>>, vector<1x8x160xbf16>
    %33 = vector.shape_cast %32 : vector<1x8x160xbf16> to vector<8x160xbf16>
    %34 = vector.shape_cast %31 : vector<8x160xbf16> to vector<1x8x160xbf16>
    tpu.vector_store %arg6[%c0_27, %c1_28, %c0_29], %34 {strides = array<i32>} : memref<1x10x160xbf16, #tpu.memory_space<vmem>>, vector<1x8x160xbf16>,
    return
  }
  func.func @transform_0(%arg0: i32) -> (i32, i32, i32, i32) {
    %c0_i32 = arith.constant 0 : i32
    %c0_i32_0 = arith.constant 0 : i32
    %c0_i32_1 = arith.constant 0 : i32
    %c0_i32_2 = arith.constant 0 : i32
    return %arg0, %c0_i32, %c0_i32_0, %c0_i32_1 : i32, i32, i32, i32
  }
  func.func @transform_1(%arg0: i32) -> (i32, i32) {
    %c0_i32 = arith.constant 0 : i32
    %c0_i32_0 = arith.constant 0 : i32
    %c0_i32_1 = arith.constant 0 : i32
    return %c0_i32, %c0_i32_0 : i32, i32
  }
  func.func @transform_2(%arg0: i32) -> (i32, i32) {
    %c0_i32 = arith.constant 0 : i32
    %c0_i32_0 = arith.constant 0 : i32
    %c0_i32_1 = arith.constant 0 : i32
    return %c0_i32, %c0_i32_0 : i32, i32
  }
  func.func @transform_3(%arg0: i32) -> (i32, i32) {
    %c0_i32 = arith.constant 0 : i32
    %c0_i32_0 = arith.constant 0 : i32
    %c0_i32_1 = arith.constant 0 : i32
    return %c0_i32, %c0_i32_0 : i32, i32
  }
  func.func @transform_4(%arg0: i32) -> (i32, i32, i32) {
    %c0_i32 = arith.constant 0 : i32
    %c0_i32_0 = arith.constant 0 : i32
    %c0_i32_1 = arith.constant 0 : i32
    return %arg0, %c0_i32, %c0_i32_0 : i32, i32, i32
  }
  func.func @transform_5(%arg0: i32) -> (i32, i32, i32) {
    %c0_i32 = arith.constant 0 : i32
    %c0_i32_0 = arith.constant 0 : i32
    %c0_i32_1 = arith.constant 0 : i32
    return %arg0, %c0_i32, %c0_i32_0 : i32, i32, i32
  }
}

module attributes {stable_mosaic.version = 11 : i64} {
  func.func @_conv2_kernel(%arg0: i32, %arg1: memref<1x10x160xbf16, #tpu.memory_space<vmem>>, %arg2: memref<3x160x128xbf16, #tpu.memory_space<vmem>>, %arg3: memref<1x128xf32, #tpu.memory_space<vmem>>, %arg4: memref<1x128xf32, #tpu.memory_space<vmem>>, %arg5: memref<1x8x128xf32, #tpu.memory_space<vmem>>) attributes {dimension_semantics = [#tpu.dimension_semantics<parallel>], iteration_bounds = array<i64: 2>, scalar_prefetch = 0 : i64, scratch_operands = 0 : i64, tpu.core_type = #tpu.core_type<tc>, window_params = [{transform_indices = @transform_0, window_bounds = array<i64: 1, 10, 160>}, {pipeline_mode = #tpu.pipeline_mode<synchronous>, transform_indices = @transform_1, window_bounds = array<i64: 3, 160, 128>}, {pipeline_mode = #tpu.pipeline_mode<synchronous>, transform_indices = @transform_2, window_bounds = array<i64: 1, 128>}, {pipeline_mode = #tpu.pipeline_mode<synchronous>, transform_indices = @transform_3, window_bounds = array<i64: 1, 128>}, {transform_indices = @transform_4, window_bounds = array<i64: 1, 8, 128>}]} {
    %c0 = arith.constant 0 : index
    %c0_0 = arith.constant 0 : index
    %c0_1 = arith.constant 0 : index
    %0 = vector.load %arg1[%c0, %c0_0, %c0_1] : memref<1x10x160xbf16, #tpu.memory_space<vmem>>, vector<1x8x160xbf16>
    %1 = vector.shape_cast %0 : vector<1x8x160xbf16> to vector<8x160xbf16>
    %c0_2 = arith.constant 0 : index
    %c0_3 = arith.constant 0 : index
    %c0_4 = arith.constant 0 : index
    %2 = vector.load %arg2[%c0_2, %c0_3, %c0_4] : memref<3x160x128xbf16, #tpu.memory_space<vmem>>, vector<1x160x128xbf16>
    %3 = vector.shape_cast %2 : vector<1x160x128xbf16> to vector<160x128xbf16>
    %cst = arith.constant dense<0.000000e+00> : vector<8x128xf32>
    %4 = tpu.matmul %1, %3, %cst {dimension_numbers = #tpu.dot_dimension_numbers<[1], [0], [0], [1], [0, 0, 1, 1], [], []>} : vector<8x160xbf16>, vector<160x128xbf16>, vector<8x128xf32> -> vector<8x128xf32>
    %c0_5 = arith.constant 0 : index
    %c1 = arith.constant 1 : index
    %c0_6 = arith.constant 0 : index
    %5 = vector.load %arg1[%c0_5, %c1, %c0_6] : memref<1x10x160xbf16, #tpu.memory_space<vmem>>, vector<1x8x160xbf16>
    %6 = vector.shape_cast %5 : vector<1x8x160xbf16> to vector<8x160xbf16>
    %c1_7 = arith.constant 1 : index
    %c0_8 = arith.constant 0 : index
    %c0_9 = arith.constant 0 : index
    %7 = vector.load %arg2[%c1_7, %c0_8, %c0_9] : memref<3x160x128xbf16, #tpu.memory_space<vmem>>, vector<1x160x128xbf16>
    %8 = vector.shape_cast %7 : vector<1x160x128xbf16> to vector<160x128xbf16>
    %cst_10 = arith.constant dense<0.000000e+00> : vector<8x128xf32>
    %9 = tpu.matmul %6, %8, %cst_10 {dimension_numbers = #tpu.dot_dimension_numbers<[1], [0], [0], [1], [0, 0, 1, 1], [], []>} : vector<8x160xbf16>, vector<160x128xbf16>, vector<8x128xf32> -> vector<8x128xf32>
    %10 = arith.addf %4, %9 : vector<8x128xf32>
    %c0_11 = arith.constant 0 : index
    %c2 = arith.constant 2 : index
    %c0_12 = arith.constant 0 : index
    %11 = vector.load %arg1[%c0_11, %c2, %c0_12] : memref<1x10x160xbf16, #tpu.memory_space<vmem>>, vector<1x8x160xbf16>
    %12 = vector.shape_cast %11 : vector<1x8x160xbf16> to vector<8x160xbf16>
    %c2_13 = arith.constant 2 : index
    %c0_14 = arith.constant 0 : index
    %c0_15 = arith.constant 0 : index
    %13 = vector.load %arg2[%c2_13, %c0_14, %c0_15] : memref<3x160x128xbf16, #tpu.memory_space<vmem>>, vector<1x160x128xbf16>
    %14 = vector.shape_cast %13 : vector<1x160x128xbf16> to vector<160x128xbf16>
    %cst_16 = arith.constant dense<0.000000e+00> : vector<8x128xf32>
    %15 = tpu.matmul %12, %14, %cst_16 {dimension_numbers = #tpu.dot_dimension_numbers<[1], [0], [0], [1], [0, 0, 1, 1], [], []>} : vector<8x160xbf16>, vector<160x128xbf16>, vector<8x128xf32> -> vector<8x128xf32>
    %16 = arith.addf %10, %15 : vector<8x128xf32>
    %c0_17 = arith.constant 0 : index
    %c0_18 = arith.constant 0 : index
    %17 = vector.load %arg3[%c0_17, %c0_18] : memref<1x128xf32, #tpu.memory_space<vmem>>, vector<1x128xf32>
    %18 = vector.broadcast %17 : vector<1x128xf32> to vector<8x128xf32>
    %19 = arith.mulf %16, %18 : vector<8x128xf32>
    %c0_19 = arith.constant 0 : index
    %c0_20 = arith.constant 0 : index
    %20 = vector.load %arg4[%c0_19, %c0_20] : memref<1x128xf32, #tpu.memory_space<vmem>>, vector<1x128xf32>
    %21 = vector.broadcast %20 : vector<1x128xf32> to vector<8x128xf32>
    %22 = arith.addf %19, %21 : vector<8x128xf32>
    %cst_21 = arith.constant 0.000000e+00 : f32
    %23 = vector.broadcast %cst_21 : f32 to vector<8x128xf32>
    %24 = arith.cmpf oge, %22, %23 : vector<8x128xf32>
    %cst_22 = arith.constant 0.00999999977 : f32
    %25 = vector.broadcast %cst_22 : f32 to vector<8x128xf32>
    %26 = arith.mulf %25, %22 : vector<8x128xf32>
    %27 = arith.select %24, %22, %26 : vector<8x128xi1>, vector<8x128xf32>
    %c0_23 = arith.constant 0 : index
    %c0_24 = arith.constant 0 : index
    %c0_25 = arith.constant 0 : index
    %28 = vector.load %arg5[%c0_23, %c0_24, %c0_25] : memref<1x8x128xf32, #tpu.memory_space<vmem>>, vector<1x8x128xf32>
    %29 = vector.shape_cast %28 : vector<1x8x128xf32> to vector<8x128xf32>
    %30 = vector.shape_cast %27 : vector<8x128xf32> to vector<1x8x128xf32>
    tpu.vector_store %arg5[%c0_23, %c0_24, %c0_25], %30 {strides = array<i32>} : memref<1x8x128xf32, #tpu.memory_space<vmem>>, vector<1x8x128xf32>,
    return
  }
  func.func @transform_0(%arg0: i32) -> (i32, i32, i32) {
    %c0_i32 = arith.constant 0 : i32
    %c0_i32_0 = arith.constant 0 : i32
    %c0_i32_1 = arith.constant 0 : i32
    return %arg0, %c0_i32, %c0_i32_0 : i32, i32, i32
  }
  func.func @transform_1(%arg0: i32) -> (i32, i32, i32) {
    %c0_i32 = arith.constant 0 : i32
    %c0_i32_0 = arith.constant 0 : i32
    %c0_i32_1 = arith.constant 0 : i32
    %c0_i32_2 = arith.constant 0 : i32
    return %c0_i32, %c0_i32_0, %c0_i32_1 : i32, i32, i32
  }
  func.func @transform_2(%arg0: i32) -> (i32, i32) {
    %c0_i32 = arith.constant 0 : i32
    %c0_i32_0 = arith.constant 0 : i32
    %c0_i32_1 = arith.constant 0 : i32
    return %c0_i32, %c0_i32_0 : i32, i32
  }
  func.func @transform_3(%arg0: i32) -> (i32, i32) {
    %c0_i32 = arith.constant 0 : i32
    %c0_i32_0 = arith.constant 0 : i32
    %c0_i32_1 = arith.constant 0 : i32
    return %c0_i32, %c0_i32_0 : i32, i32
  }
  func.func @transform_4(%arg0: i32) -> (i32, i32, i32) {
    %c0_i32 = arith.constant 0 : i32
    %c0_i32_0 = arith.constant 0 : i32
    %c0_i32_1 = arith.constant 0 : i32
    return %arg0, %c0_i32, %c0_i32_0 : i32, i32, i32
  }
}

</mosaic_0001>

<llo_original>
// kernel: conv2x_forward.3
$region0: #{conv2x_forward.3}
  #allocation0 [shape = 'u32[]', space=smem, size = 0x4, offset = 0x4, fixed_abs, tag = 'smem constant byte address 0x4 - core index']
  #allocation1 [shape = 'u32[144,128]{1,0:T(1,128)}', space=vmem, size = 0x12000, scoped, tag = 'internal scratch']
  %s0 = inlined_call_operand.vmem [shape: bf16[2,10,160], index: 0, kind: input, shape index: {}]
  %s1 = inlined_call_operand.vmem [shape: bf16[3,160,128], index: 1, kind: input, shape index: {}]
  %s2 = inlined_call_operand.vmem [shape: f32[1,128], index: 2, kind: input, shape index: {}]
  %s3 = inlined_call_operand.vmem [shape: f32[1,128], index: 3, kind: input, shape index: {}]
  %s4 = inlined_call_operand.vmem [shape: f32[2,8,128], index: 4, kind: output, shape index: {}]
  %s5 = sld [smem:[#allocation0]]
  $region49: #{conv2x_forward.3} parent=0
    _
  %s7 = ssub.s32 1, %s5
  %s8 = scalar_select 0, %s7, %s5
  loop: start=0, step=1, limit=4
  $region2: #{conv2x_forward.3} parent=0 // loop_pre_header
    _
  $region3: #{conv2x_forward.3} parent=0 // loop_header
    %s10 = sphi 0, %s14
    %p11 = scmp.ge.s32.totalorder %s10, 4
    %s20 = sphi 0, %s22
    %s23 = sphi 0, %s20
    %s24 = sphi 0, %s23
    %s40 = sphi 0, %s24
    %s44 = sphi 0, %s44
    %s46 = sphi 0, %s44
    %s47 = sphi 0, %s46
    %s61 = sphi 0, %s47
    %s65 = sphi 0, %s65
    %s67 = sphi 0, %s65
    %s68 = sphi 0, %s67
    %s82 = sphi 0, %s68
    %s86 = sphi 0, %s86
    %s88 = sphi 0, %s86
    %s89 = sphi 0, %s88
    %s103 = sphi 0, %s89
    %s109 = sphi 0, %s111
    %s112 = sphi 0, %s109
    %s113 = sphi 0, %s112
    %s129 = sphi 0, %s113
  $region4: #{conv2x_forward.3} parent=0 // loop_header_branch
    %13 = sbr.rel (%p11) target = $region8
  $region5: #{conv2x_forward.3} parent=0 // loop_body
    %s15 = ssub.s32 %s10, 1
    %s16 = ssub.s32 %s10, 2
    %s17 = sadd.s32 %s10, 1
    %s18 = ssub.s32 %s10, %s17
    %p19 = scmp.eq.s32.totalorder %s18, 0
    %s21 = sadd.s32 %s20, 1
    %s22 = scalar_select %p19, %s20, %s21
    %p25 = pneg %p19
    %p26 = scmp.eq.s32.totalorder %s10, 1
    %p27 = por %p25, %p26
    %p28 = scmp.ne.s32.totalorder %s20, %s23
    %p29 = scmp.eq.s32.totalorder %s10, 0
    %p30 = por %p28, %p29
    %p31 = scmp.ne.s32.totalorder %s20, %s23
    %p32 = scmp.eq.s32.totalorder %s15, 1
    %p33 = por %p31, %p32
    %p34 = scmp.ne.s32.totalorder %s23, %s24
    %p35 = scmp.eq.s32.totalorder %s15, 0
    %p36 = por %p34, %p35
    %p37 = scmp.ne.s32.totalorder %s23, %s24
    %p38 = scmp.eq.s32.totalorder %s16, 1
    %p39 = por %p37, %p38
    %p41 = scmp.ne.s32.totalorder %s24, %s40
    %p42 = scmp.eq.s32.totalorder %s16, 0
    %p43 = por %p41, %p42
    %s45 = sadd.s32 %s44, 1
    %p48 = scmp.eq.s32.totalorder %s10, 1
    %p49 = scmp.ne.s32.totalorder %s44, %s46
    %p50 = scmp.eq.s32.totalorder %s10, 0
    %p51 = por %p49, %p50
    %p52 = scmp.ne.s32.totalorder %s44, %s46
    %p53 = scmp.eq.s32.totalorder %s15, 1
    %p54 = por %p52, %p53
    %p55 = scmp.ne.s32.totalorder %s46, %s47
    %p56 = scmp.eq.s32.totalorder %s15, 0
    %p57 = por %p55, %p56
    %p58 = scmp.ne.s32.totalorder %s46, %s47
    %p59 = scmp.eq.s32.totalorder %s16, 1
    %p60 = por %p58, %p59
    %p62 = scmp.ne.s32.totalorder %s47, %s61
    %p63 = scmp.eq.s32.totalorder %s16, 0
    %p64 = por %p62, %p63
    %s66 = sadd.s32 %s65, 1
    %p69 = scmp.eq.s32.totalorder %s10, 1
    %p70 = scmp.ne.s32.totalorder %s65, %s67
    %p71 = scmp.eq.s32.totalorder %s10, 0
    %p72 = por %p70, %p71
    %p73 = scmp.ne.s32.totalorder %s65, %s67
    %p74 = scmp.eq.s32.totalorder %s15, 1
    %p75 = por %p73, %p74
    %p76 = scmp.ne.s32.totalorder %s67, %s68
    %p77 = scmp.eq.s32.totalorder %s15, 0
    %p78 = por %p76, %p77
    %p79 = scmp.ne.s32.totalorder %s67, %s68
    %p80 = scmp.eq.s32.totalorder %s16, 1
    %p81 = por %p79, %p80
    %p83 = scmp.ne.s32.totalorder %s68, %s82
    %p84 = scmp.eq.s32.totalorder %s16, 0
    %p85 = por %p83, %p84
    %s87 = sadd.s32 %s86, 1
    %p90 = scmp.eq.s32.totalorder %s10, 1
    %p91 = scmp.ne.s32.totalorder %s86, %s88
    %p92 = scmp.eq.s32.totalorder %s10, 0
    %p93 = por %p91, %p92
    %p94 = scmp.ne.s32.totalorder %s86, %s88
    %p95 = scmp.eq.s32.totalorder %s15, 1
    %p96 = por %p94, %p95
    %p97 = scmp.ne.s32.totalorder %s88, %s89
    %p98 = scmp.eq.s32.totalorder %s15, 0
    %p99 = por %p97, %p98
    %p100 = scmp.ne.s32.totalorder %s88, %s89
    %p101 = scmp.eq.s32.totalorder %s16, 1
    %p102 = por %p100, %p101
    %p104 = scmp.ne.s32.totalorder %s89, %s103
    %p105 = scmp.eq.s32.totalorder %s16, 0
    %p106 = por %p104, %p105
    %s107 = ssub.s32 %s10, %s17
    %p108 = scmp.eq.s32.totalorder %s107, 0
    %s110 = sadd.s32 %s109, 1
    %s111 = scalar_select %p108, %s109, %s110
    %p114 = pneg %p108
    %p115 = scmp.eq.s32.totalorder %s10, 1
    %p116 = por %p114, %p115
    %p117 = scmp.ne.s32.totalorder %s109, %s112
    %p118 = scmp.eq.s32.totalorder %s10, 0
    %p119 = por %p117, %p118
    %p120 = scmp.ne.s32.totalorder %s109, %s112
    %p121 = scmp.eq.s32.totalorder %s15, 1
    %p122 = por %p120, %p121
    %p123 = scmp.ne.s32.totalorder %s112, %s113
    %p124 = scmp.eq.s32.totalorder %s15, 0
    %p125 = por %p123, %p124
    %p126 = scmp.ne.s32.totalorder %s112, %s113
    %p127 = scmp.eq.s32.totalorder %s16, 1
    %p128 = por %p126, %p127
    %p130 = scmp.ne.s32.totalorder %s113, %s129
    %p131 = scmp.eq.s32.totalorder %s16, 0
    %p132 = por %p130, %p131
    %p133 = scmp.le.s32.totalorder 1, %s10
    %p134 = scmp.lt.s32.totalorder %s10, 3
    %p135 = pnand %p133, %p134
    %p136 = pneg %p135
    // Predicated region
    $region9: #{conv2x_forward.3} parent=5 // pred_check
      _
    $region10: #{conv2x_forward.3} parent=5 // pred_check_branch
      %138 = sbr.rel (%p135) target = $region12
    $region11: #{conv2x_forward.3} parent=5 // pred_region
      %s139 = ssub.s32 %s10, 1
      // Predicated region
      $region13: #{conv2x_forward.3} parent=11 // pred_check
        %p140 = pneg %p57
      $region14: #{conv2x_forward.3} parent=11 // pred_check_branch
        %142 = sbr.rel (%p140) target = $region16
      $region15: #{conv2x_forward.3} parent=11 // pred_region
        _
      $region16: #{conv2x_forward.3} parent=11 // pred_fallthru
        _
      // Predicated region
      $region17: #{conv2x_forward.3} parent=11 // pred_check
        %p143 = pneg %p78
      $region18: #{conv2x_forward.3} parent=11 // pred_check_branch
        %145 = sbr.rel (%p143) target = $region20
      $region19: #{conv2x_forward.3} parent=11 // pred_region
        _
      $region20: #{conv2x_forward.3} parent=11 // pred_fallthru
        _
      // Predicated region
      $region21: #{conv2x_forward.3} parent=11 // pred_check
        %p146 = pneg %p99
      $region22: #{conv2x_forward.3} parent=11 // pred_check_branch
        %148 = sbr.rel (%p146) target = $region24
      $region23: #{conv2x_forward.3} parent=11 // pred_region
        _
      $region24: #{conv2x_forward.3} parent=11 // pred_fallthru
        _
    $region12: #{conv2x_forward.3} parent=5 // pred_fallthru
      _
    %p149 = scmp.lt.s32.totalorder %s10, 2
    // Predicated region
    $region25: #{conv2x_forward.3} parent=5 // pred_check
      %p150 = pneg %p149
    $region26: #{conv2x_forward.3} parent=5 // pred_check_branch
      %152 = sbr.rel (%p150) target = $region28
    $region27: #{conv2x_forward.3} parent=5 // pred_region
      // Predicated region
      $region29: #{conv2x_forward.3} parent=27 // pred_check
        %p153 = pneg %p30
      $region30: #{conv2x_forward.3} parent=27 // pred_check_branch
        %155 = sbr.rel (%p153) target = $region32
      $region31: #{conv2x_forward.3} parent=27 // pred_region
        %p156 = scmp.lt.s32.totalorder %s10, 1
        %s157 = scalar_select %p156, %s10, 1
        %s158 = smul.addr %s157, 4
        %s159 = smul.addr %s158, 4
        %s160 = scalar_lea.vmem %s0, %s159
      $region32: #{conv2x_forward.3} parent=27 // pred_fallthru
        _
    $region28: #{conv2x_forward.3} parent=5 // pred_fallthru
      _
    %p161 = scmp.le.s32.totalorder 1, %s10
    %p162 = scmp.lt.s32.totalorder %s10, 3
    %p163 = pnand %p161, %p162
    %p164 = pneg %p163
    // Predicated region
    $region33: #{conv2x_forward.3} parent=5 // pred_check
      _
    $region34: #{conv2x_forward.3} parent=5 // pred_check_branch
      %166 = sbr.rel (%p163) target = $region36
    $region35: #{conv2x_forward.3} parent=5 // pred_region
      %s167 = ssub.s32 %s10, 1
      %p168 = scmp.lt.s32.totalorder %s15, 1
      %s169 = scalar_select %p168, %s15, 1
      %s170 = smul.addr %s169, 4
      %s171 = smul.addr %s170, 4
      %s172 = scalar_lea.vmem %s0, %s171
      %p173 = pneg %p36
      %p174 = pneg %p33
      %p175 = pneg %p57
      %p176 = pneg %p54
      %p177 = pneg %p78
      %p178 = pneg %p75
      %p179 = pneg %p99
      %p180 = pneg %p96
      %p181 = pneg %p125
      %p182 = pneg %p122
      %p183 = scmp.lt.s32.totalorder %s15, 1
      %s184 = scalar_select %p183, %s15, 1
      %s185 = smul.addr %s184, 8
      %s186 = scalar_lea.vmem %s4, %s185
      %p187 = scmp.lt.s32.totalorder %s15, 1
      %s188 = scalar_select %p187, %s15, 1
      %s189 = smul.addr %s188, 4
      %s190 = smul.addr %s189, 4
      %s191 = scalar_lea.vmem %s0, %s190
      %p192 = scmp.lt.s32.totalorder %s15, 1
      %s193 = scalar_select %p192, %s15, 1
      %s194 = smul.addr %s193, 8
      %s195 = scalar_lea.vmem %s4, %s194
      %v197 = vld [vmem:[%s191] sm:$0xff]
      %v198 = vld [vmem:[%s1] sm:$0xf]
      %v199 = vld [vmem:[%s1 + $0x4] sm:$0xf]
      %v200 = vld [vmem:[%s1 + $0x8] sm:$0xf]
      %v201 = vld [vmem:[%s1 + $0xc] sm:$0xf]
      %v202 = vld [vmem:[%s1 + $0x10] sm:$0xf]
      %v203 = vld [vmem:[%s1 + $0x14] sm:$0xf]
      %v204 = vld [vmem:[%s1 + $0x18] sm:$0xf]
      %v205 = vld [vmem:[%s1 + $0x1c] sm:$0xf]
      %v206 = vld [vmem:[%s1 + $0x20] sm:$0xf]
      %v207 = vld [vmem:[%s1 + $0x24] sm:$0xf]
      %v208 = vld [vmem:[%s1 + $0x28] sm:$0xf]
      %v209 = vld [vmem:[%s1 + $0x2c] sm:$0xf]
      %v210 = vld [vmem:[%s1 + $0x30] sm:$0xf]
      %v211 = vld [vmem:[%s1 + $0x34] sm:$0xf]
      %v212 = vld [vmem:[%s1 + $0x38] sm:$0xf]
      %v213 = vld [vmem:[%s1 + $0x3c] sm:$0xf]
      %v214 = vld [vmem:[%s1 + $0x40] sm:$0xf]
      %v215 = vld [vmem:[%s1 + $0x44] sm:$0xf]
      %v216 = vld [vmem:[%s1 + $0x48] sm:$0xf]
      %v217 = vld [vmem:[%s1 + $0x4c] sm:$0xf]
      %v218 = vld [vmem:[%s191 + $0x8] sm:$0x11]
      %s219 = scalar_lea.vmem %s1, 80
      %v220 = vld [vmem:[%s219] sm:$0xf]
      %v221 = vld [vmem:[%s219 + $0x4] sm:$0xf]
      %v222 = vld [vmem:[%s219 + $0x8] sm:$0xf]
      %v223 = vld [vmem:[%s219 + $0xc] sm:$0xf]
      %v224 = vld [vmem:[%s219 + $0x10] sm:$0xf]
      %v225 = vld [vmem:[%s219 + $0x14] sm:$0xf]
      %v226 = vld [vmem:[%s219 + $0x18] sm:$0xf]
      %v227 = vld [vmem:[%s219 + $0x1c] sm:$0xf]
      %v228 = vld [vmem:[%s219 + $0x20] sm:$0xf]
      %v229 = vld [vmem:[%s219 + $0x24] sm:$0xf]
      %v230 = vld [vmem:[%s219 + $0x28] sm:$0xf]
      %v231 = vld [vmem:[%s219 + $0x2c] sm:$0xf]
      %v232 = vld [vmem:[%s219 + $0x30] sm:$0xf]
      %v233 = vld [vmem:[%s219 + $0x34] sm:$0xf]
      %v234 = vld [vmem:[%s219 + $0x38] sm:$0xf]
      %v235 = vld [vmem:[%s219 + $0x3c] sm:$0xf]
      %v236 = vld [vmem:[%s219 + $0x40] sm:$0xf]
      %v237 = vld [vmem:[%s219 + $0x44] sm:$0xf]
      %v238 = vld [vmem:[%s219 + $0x48] sm:$0xf]
      %v239 = vld [vmem:[%s219 + $0x4c] sm:$0xf]
      %v242 = vunpack.c.l.b16 %v197
      %v243 = vunpack.c.h.b16 %v197
      %v244 = vunpack.c.l.b16 %v218
      %v245 = vunpack.c.h.b16 %v218
      %v246 = vpack.c.b16 %v244, %v242
      %v247 = vpack.c.b16 %v245, %v243
      %v249 = vshrl.u32 %v246, 16
      %v251 = vshll.u32 %v246, 16
      %v253 = vrot.slane %v251, 1
      %v254 = vor.u32 %v249, %v253
      %v256 = vshrl.u32 %v247, 16
      %v258 = vshll.u32 %v247, 16
      %v260 = vrot.slane %v258, 1
      %v261 = vor.u32 %v256, %v260
      %v283 = vunpack.c.l.b16 %v220
      %v284 = vunpack.c.l.b16 %v221
      %v285 = vunpack.c.l.b16 %v222
      %v286 = vunpack.c.l.b16 %v223
      %v287 = vunpack.c.l.b16 %v224
      %v288 = vunpack.c.l.b16 %v225
      %v289 = vunpack.c.l.b16 %v226
      %v290 = vunpack.c.l.b16 %v227
      %v291 = vunpack.c.l.b16 %v228
      %v292 = vunpack.c.l.b16 %v229
      %v293 = vunpack.c.l.b16 %v230
      %v294 = vunpack.c.l.b16 %v231
      %v295 = vunpack.c.l.b16 %v232
      %v296 = vunpack.c.l.b16 %v233
      %v297 = vunpack.c.l.b16 %v234
      %v298 = vunpack.c.l.b16 %v235
      %v299 = vunpack.c.l.b16 %v236
      %v300 = vunpack.c.l.b16 %v237
      %v301 = vunpack.c.l.b16 %v238
      %v302 = vunpack.c.l.b16 %v239
      %v303 = vpack.c.b16 %v284, %v283
      %v304 = vpack.c.b16 %v286, %v285
      %v305 = vpack.c.b16 %v288, %v287
      %v306 = vpack.c.b16 %v290, %v289
      %v307 = vpack.c.b16 %v292, %v291
      %v308 = vpack.c.b16 %v294, %v293
      %v309 = vpack.c.b16 %v296, %v295
      %v310 = vpack.c.b16 %v298, %v297
      %v311 = vpack.c.b16 %v300, %v299
      %v312 = vpack.c.b16 %v302, %v301
      %vm323 = vcmask 261120
      %v325 = vsel %vm323, %v261, 0
      %327 = vmatprep.subr.bf16.mxu0 0
      %328 = vmatpush1.bf16.msra.mxu0 %v303
      %329 = vmatprep.subr.bf16.mxu0 0
      %330 = vmatpush1.bf16.msra.mxu0 %v304
      %331 = vmatprep.subr.bf16.mxu0 0
      %332 = vmatpush1.bf16.msra.mxu0 %v305
      %333 = vmatprep.subr.bf16.mxu0 0
      %334 = vmatpush1.bf16.msra.mxu0 %v306
      %335 = vmatprep.subr.bf16.mxu0 0
      %336 = vmatpush1.bf16.msra.mxu0 %v307
      %337 = vmatprep.subr.bf16.mxu0 0
      %338 = vmatpush1.bf16.msra.mxu0 %v308
      %339 = vmatprep.subr.bf16.mxu0 0
      %340 = vmatpush1.bf16.msra.mxu0 %v309
      %341 = vmatprep.subr.bf16.mxu0 0
      %342 = vmatpush1.bf16.msra.mxu0 %v310
      %343 = vmatprep.subr.bf16.mxu0 0
      %344 = vmatpush1.bf16.msra.mxu0 %v311
      %345 = vmatprep.subr.bf16.mxu0 0
      %346 = vmatpush1.bf16.msra.mxu0 %v312
      %347 = vmatprep.subr.bf16.mxu0 0
      %348 = vmatpush1.bf16.msra.mxu0 0
      %349 = vmatprep.subr.bf16.mxu0 0
      %350 = vmatpush1.bf16.msra.mxu0 0
      %351 = vmatprep.subr.bf16.mxu0 0
      %352 = vmatpush1.bf16.msra.mxu0 0
      %353 = vmatprep.subr.bf16.mxu0 0
      %354 = vmatpush1.bf16.msra.mxu0 0
      %355 = vmatprep.subr.bf16.mxu0 0
      %356 = vmatpush1.bf16.msra.mxu0 0
      %357 = vmatprep.subr.bf16.mxu0 0
      %358 = vmatpush1.bf16.msra.mxu0 0
      %359 = vmatprep.mubr.bf16.mxu0 %v325
      %360 = vmatmul.mubr.bf16.gmra.mrb[0].mxu0 %v254
      %v361 = vpop.f32.mrb[0].mxu0
      %v362 = vadd.f32 0.0, %v361
      %v363 = vpop.f32.mrb[0].mxu0
      %v364 = vpop.f32.mrb[0].mxu0
      %v365 = vpop.f32.mrb[0].mxu0
      %366 = vdwg.mxu0
      %v367 = vpack.c.b16 %v242, %v242
      %v368 = vpack.c.b16 %v243, %v243
      %v390 = vunpack.c.l.b16 %v198
      %v391 = vunpack.c.l.b16 %v199
      %v392 = vunpack.c.l.b16 %v200
      %v393 = vunpack.c.l.b16 %v201
      %v394 = vunpack.c.l.b16 %v202
      %v395 = vunpack.c.l.b16 %v203
      %v396 = vunpack.c.l.b16 %v204
      %v397 = vunpack.c.l.b16 %v205
      %v398 = vunpack.c.l.b16 %v206
      %v399 = vunpack.c.l.b16 %v207
      %v400 = vunpack.c.l.b16 %v208
      %v401 = vunpack.c.l.b16 %v209
      %v402 = vunpack.c.l.b16 %v210
      %v403 = vunpack.c.l.b16 %v211
      %v404 = vunpack.c.l.b16 %v212
      %v405 = vunpack.c.l.b16 %v213
      %v406 = vunpack.c.l.b16 %v214
      %v407 = vunpack.c.l.b16 %v215
      %v408 = vunpack.c.l.b16 %v216
      %v409 = vunpack.c.l.b16 %v217
      %v410 = vpack.c.b16 %v391, %v390
      %v411 = vpack.c.b16 %v393, %v392
      %v412 = vpack.c.b16 %v395, %v394
      %v413 = vpack.c.b16 %v397, %v396
      %v414 = vpack.c.b16 %v399, %v398
      %v415 = vpack.c.b16 %v401, %v400
      %v416 = vpack.c.b16 %v403, %v402
      %v417 = vpack.c.b16 %v405, %v404
      %v418 = vpack.c.b16 %v407, %v406
      %v419 = vpack.c.b16 %v409, %v408
      %v431 = vsel %vm323, %v368, 0
      %433 = vmatprep.subr.bf16.mxu0 0
      %434 = vmatpush1.bf16.msra.mxu0 %v410
      %435 = vmatprep.subr.bf16.mxu0 0
      %436 = vmatpush1.bf16.msra.mxu0 %v411
      %437 = vmatprep.subr.bf16.mxu0 0
      %438 = vmatpush1.bf16.msra.mxu0 %v412
      %439 = vmatprep.subr.bf16.mxu0 0
      %440 = vmatpush1.bf16.msra.mxu0 %v413
      %441 = vmatprep.subr.bf16.mxu0 0
      %442 = vmatpush1.bf16.msra.mxu0 %v414
      %443 = vmatprep.subr.bf16.mxu0 0
      %444 = vmatpush1.bf16.msra.mxu0 %v415
      %445 = vmatprep.subr.bf16.mxu0 0
      %446 = vmatpush1.bf16.msra.mxu0 %v416
      %447 = vmatprep.subr.bf16.mxu0 0
      %448 = vmatpush1.bf16.msra.mxu0 %v417
      %449 = vmatprep.subr.bf16.mxu0 0
      %450 = vmatpush1.bf16.msra.mxu0 %v418
      %451 = vmatprep.subr.bf16.mxu0 0
      %452 = vmatpush1.bf16.msra.mxu0 %v419
      %453 = vmatprep.subr.bf16.mxu0 0
      %454 = vmatpush1.bf16.msra.mxu0 0
      %455 = vmatprep.subr.bf16.mxu0 0
      %456 = vmatpush1.bf16.msra.mxu0 0
      %457 = vmatprep.subr.bf16.mxu0 0
      %458 = vmatpush1.bf16.msra.mxu0 0
      %459 = vmatprep.subr.bf16.mxu0 0
      %460 = vmatpush1.bf16.msra.mxu0 0
      %461 = vmatprep.subr.bf16.mxu0 0
      %462 = vmatpush1.bf16.msra.mxu0 0
      %463 = vmatprep.subr.bf16.mxu0 0
      %464 = vmatpush1.bf16.msra.mxu0 0
      %465 = vmatprep.mubr.bf16.mxu0 %v431
      %466 = vmatmul.mubr.bf16.gmra.mrb[0].mxu0 %v367
      %v467 = vpop.f32.mrb[0].mxu0
      %v468 = vadd.f32 %v362, %v467
      %v469 = vpop.f32.mrb[0].mxu0
      %v470 = vpop.f32.mrb[0].mxu0
      %v471 = vpop.f32.mrb[0].mxu0
      %472 = vdwg.mxu0
      %v473 = vld [vmem:[%s191] sm:$0xee]
      %s474 = scalar_lea.vmem %s1, 160
      %v475 = vld [vmem:[%s474] sm:$0xf]
      %v476 = vld [vmem:[%s474 + $0x4] sm:$0xf]
      %v477 = vld [vmem:[%s474 + $0x8] sm:$0xf]
      %v478 = vld [vmem:[%s474 + $0xc] sm:$0xf]
      %v479 = vld [vmem:[%s474 + $0x10] sm:$0xf]
      %v480 = vld [vmem:[%s474 + $0x14] sm:$0xf]
      %v481 = vld [vmem:[%s474 + $0x18] sm:$0xf]
      %v482 = vld [vmem:[%s474 + $0x1c] sm:$0xf]
      %v483 = vld [vmem:[%s474 + $0x20] sm:$0xf]
      %v484 = vld [vmem:[%s474 + $0x24] sm:$0xf]
      %v485 = vld [vmem:[%s474 + $0x28] sm:$0xf]
      %v486 = vld [vmem:[%s474 + $0x2c] sm:$0xf]
      %v487 = vld [vmem:[%s474 + $0x30] sm:$0xf]
      %v488 = vld [vmem:[%s474 + $0x34] sm:$0xf]
      %v489 = vld [vmem:[%s474 + $0x38] sm:$0xf]
      %v490 = vld [vmem:[%s474 + $0x3c] sm:$0xf]
      %v491 = vld [vmem:[%s474 + $0x40] sm:$0xf]
      %v492 = vld [vmem:[%s474 + $0x44] sm:$0xf]
      %v493 = vld [vmem:[%s474 + $0x48] sm:$0xf]
      %v494 = vld [vmem:[%s474 + $0x4c] sm:$0xf]
      %v496 = vunpack.c.l.b16 %v473
      %v497 = vunpack.c.h.b16 %v473
      %v498 = vpack.c.b16 %v244, %v496
      %v499 = vpack.c.b16 %v245, %v497
      %v500 = vrot.slane %v498, 1
      %v501 = vrot.slane %v499, 1
      %v523 = vunpack.c.l.b16 %v475
      %v524 = vunpack.c.l.b16 %v476
      %v525 = vunpack.c.l.b16 %v477
      %v526 = vunpack.c.l.b16 %v478
      %v527 = vunpack.c.l.b16 %v479
      %v528 = vunpack.c.l.b16 %v480
      %v529 = vunpack.c.l.b16 %v481
      %v530 = vunpack.c.l.b16 %v482
      %v531 = vunpack.c.l.b16 %v483
      %v532 = vunpack.c.l.b16 %v484
      %v533 = vunpack.c.l.b16 %v485
      %v534 = vunpack.c.l.b16 %v486
      %v535 = vunpack.c.l.b16 %v487
      %v536 = vunpack.c.l.b16 %v488
      %v537 = vunpack.c.l.b16 %v489
      %v538 = vunpack.c.l.b16 %v490
      %v539 = vunpack.c.l.b16 %v491
      %v540 = vunpack.c.l.b16 %v492
      %v541 = vunpack.c.l.b16 %v493
      %v542 = vunpack.c.l.b16 %v494
      %v543 = vpack.c.b16 %v524, %v523
      %v544 = vpack.c.b16 %v526, %v525
      %v545 = vpack.c.b16 %v528, %v527
      %v546 = vpack.c.b16 %v530, %v529
      %v547 = vpack.c.b16 %v532, %v531
      %v548 = vpack.c.b16 %v534, %v533
      %v549 = vpack.c.b16 %v536, %v535
      %v550 = vpack.c.b16 %v538, %v537
      %v551 = vpack.c.b16 %v540, %v539
      %v552 = vpack.c.b16 %v542, %v541
      %v564 = vsel %vm323, %v501, 0
      %566 = vmatprep.subr.bf16.mxu0 0
      %567 = vmatpush1.bf16.msra.mxu0 %v543
      %568 = vmatprep.subr.bf16.mxu0 0
      %569 = vmatpush1.bf16.msra.mxu0 %v544
      %570 = vmatprep.subr.bf16.mxu0 0
      %571 = vmatpush1.bf16.msra.mxu0 %v545
      %572 = vmatprep.subr.bf16.mxu0 0
      %573 = vmatpush1.bf16.msra.mxu0 %v546
      %574 = vmatprep.subr.bf16.mxu0 0
      %575 = vmatpush1.bf16.msra.mxu0 %v547
      %576 = vmatprep.subr.bf16.mxu0 0
      %577 = vmatpush1.bf16.msra.mxu0 %v548
      %578 = vmatprep.subr.bf16.mxu0 0
      %579 = vmatpush1.bf16.msra.mxu0 %v549
      %580 = vmatprep.subr.bf16.mxu0 0
      %581 = vmatpush1.bf16.msra.mxu0 %v550
      %582 = vmatprep.subr.bf16.mxu0 0
      %583 = vmatpush1.bf16.msra.mxu0 %v551
      %584 = vmatprep.subr.bf16.mxu0 0
      %585 = vmatpush1.bf16.msra.mxu0 %v552
      %586 = vmatprep.subr.bf16.mxu0 0
      %587 = vmatpush1.bf16.msra.mxu0 0
      %588 = vmatprep.subr.bf16.mxu0 0
      %589 = vmatpush1.bf16.msra.mxu0 0
      %590 = vmatprep.subr.bf16.mxu0 0
      %591 = vmatpush1.bf16.msra.mxu0 0
      %592 = vmatprep.subr.bf16.mxu0 0
      %593 = vmatpush1.bf16.msra.mxu0 0
      %594 = vmatprep.subr.bf16.mxu0 0
      %595 = vmatpush1.bf16.msra.mxu0 0
      %596 = vmatprep.subr.bf16.mxu0 0
      %597 = vmatpush1.bf16.msra.mxu0 0
      %598 = vmatprep.mubr.bf16.mxu0 %v564
      %599 = vmatmul.mubr.bf16.gmra.mrb[0].mxu0 %v500
      %v600 = vpop.f32.mrb[0].mxu0
      %v601 = vadd.f32 0.0, %v600
      %v602 = vpop.f32.mrb[0].mxu0
      %v603 = vpop.f32.mrb[0].mxu0
      %v604 = vpop.f32.mrb[0].mxu0
      %605 = vdwg.mxu0
      %v606 = vadd.f32 %v468, %v601
      %v607 = vld [vmem:[%s2] sm:$0x1]
      %v609 = vlaneseq
      %v610 = vshrl.u32 %v609, 7
      %v611 = vsub.s32 0, %v610
      %v612 = vrot.slane %v607, %v611
      %v614 = vmul.f32 %v606, %v612
      %v615 = vld [vmem:[%s3] sm:$0x1]
      %v617 = vlaneseq
      %v618 = vshrl.u32 %v617, 7
      %v619 = vsub.s32 0, %v618
      %v620 = vrot.slane %v615, %v619
      %v622 = vadd.f32 %v614, %v620
      %vm623 = vcmp.ge.f32.partialorder %v622, 0.0
      %v624 = vmul.f32 %v622, 0.01
      %v625 = vsel %vm623, %v622, %v624
      %626 = vst [vmem:[%s195] sm:$0xff] %v625
      %p627 = scmp.lt.s32.totalorder %s15, 1
      %s628 = scalar_select %p627, %s15, 1
      %s629 = smul.addr %s628, 8
      %s630 = scalar_lea.vmem %s4, %s629
      // Predicated region
      $region37: #{conv2x_forward.3} parent=35 // pred_check
        %p631 = pneg %p122
      $region38: #{conv2x_forward.3} parent=35 // pred_check_branch
        %633 = sbr.rel (%p631) target = $region40
      $region39: #{conv2x_forward.3} parent=35 // pred_region
        _
      $region40: #{conv2x_forward.3} parent=35 // pred_fallthru
        _
    $region36: #{conv2x_forward.3} parent=5 // pred_fallthru
      _
    %p634 = scmp.le.s32.totalorder 2, %s10
    // Predicated region
    $region41: #{conv2x_forward.3} parent=5 // pred_check
      %p635 = pneg %p634
    $region42: #{conv2x_forward.3} parent=5 // pred_check_branch
      %637 = sbr.rel (%p635) target = $region44
    $region43: #{conv2x_forward.3} parent=5 // pred_region
      %s638 = ssub.s32 %s10, 2
      // Predicated region
      $region45: #{conv2x_forward.3} parent=43 // pred_check
        %p639 = pneg %p128
      $region46: #{conv2x_forward.3} parent=43 // pred_check_branch
        %641 = sbr.rel (%p639) target = $region48
      $region47: #{conv2x_forward.3} parent=43 // pred_region
        %p642 = scmp.lt.s32.totalorder %s16, 1
        %s643 = scalar_select %p642, %s16, 1
        %s644 = smul.addr %s643, 8
        %s645 = scalar_lea.vmem %s4, %s644
      $region48: #{conv2x_forward.3} parent=43 // pred_fallthru
        _
    $region44: #{conv2x_forward.3} parent=5 // pred_fallthru
      _
  $region6: #{conv2x_forward.3} parent=0 // loop_footer
    %s14 = sadd.s32 1, %s10
  $region7: #{conv2x_forward.3} parent=0 // loop_footer_branch
    %9 = sbr.rel target = $region3
  $region8: #{conv2x_forward.3} parent=0 // loop_exit
    _

// kernel: conv2x_forward.2
$region0: #{conv2x_forward.2}
  #allocation0 [shape = 'u32[]', space=smem, size = 0x4, offset = 0x4, fixed_abs, tag = 'smem constant byte address 0x4 - core index']
  #allocation1 [shape = 'u32[144,128]{1,0:T(1,128)}', space=vmem, size = 0x12000, scoped, tag = 'internal scratch']
  %s0 = inlined_call_operand.vmem [shape: bf16[2,2,9,128], index: 0, kind: input, shape index: {}]
  %s1 = inlined_call_operand.vmem [shape: bf16[384,160], index: 1, kind: input, shape index: {}]
  %s2 = inlined_call_operand.vmem [shape: f32[1,160], index: 2, kind: input, shape index: {}]
  %s3 = inlined_call_operand.vmem [shape: f32[1,160], index: 3, kind: input, shape index: {}]
  %s4 = inlined_call_operand.vmem [shape: bf16[2,8,160], index: 4, kind: input, shape index: {}]
  %s5 = inlined_call_operand.vmem [shape: bf16[2,10,160], index: 5, kind: output, shape index: {}]
  %s6 = sld [smem:[#allocation0]]
  $region53: #{conv2x_forward.2} parent=0
    _
  %s8 = ssub.s32 1, %s6
  %s9 = scalar_select 0, %s8, %s6
  loop: start=0, step=1, limit=4
  $region2: #{conv2x_forward.2} parent=0 // loop_pre_header
    _
  $region3: #{conv2x_forward.2} parent=0 // loop_header
    %s11 = sphi 0, %s15
    %p12 = scmp.ge.s32.totalorder %s11, 4
    %s21 = sphi 0, %s23
    %s24 = sphi 0, %s21
    %s25 = sphi 0, %s24
    %s41 = sphi 0, %s25
    %s45 = sphi 0, %s45
    %s47 = sphi 0, %s45
    %s48 = sphi 0, %s47
    %s62 = sphi 0, %s48
    %s66 = sphi 0, %s66
    %s68 = sphi 0, %s66
    %s69 = sphi 0, %s68
    %s83 = sphi 0, %s69
    %s87 = sphi 0, %s87
    %s89 = sphi 0, %s87
    %s90 = sphi 0, %s89
    %s104 = sphi 0, %s90
    %s110 = sphi 0, %s112
    %s113 = sphi 0, %s110
    %s114 = sphi 0, %s113
    %s130 = sphi 0, %s114
    %s136 = sphi 0, %s138
    %s139 = sphi 0, %s136
    %s140 = sphi 0, %s139
    %s156 = sphi 0, %s140
  $region4: #{conv2x_forward.2} parent=0 // loop_header_branch
    %14 = sbr.rel (%p12) target = $region8
  $region5: #{conv2x_forward.2} parent=0 // loop_body
    %s16 = ssub.s32 %s11, 1
    %s17 = ssub.s32 %s11, 2
    %s18 = sadd.s32 %s11, 1
    %s19 = ssub.s32 %s11, %s18
    %p20 = scmp.eq.s32.totalorder %s19, 0
    %s22 = sadd.s32 %s21, 1
    %s23 = scalar_select %p20, %s21, %s22
    %p26 = pneg %p20
    %p27 = scmp.eq.s32.totalorder %s11, 1
    %p28 = por %p26, %p27
    %p29 = scmp.ne.s32.totalorder %s21, %s24
    %p30 = scmp.eq.s32.totalorder %s11, 0
    %p31 = por %p29, %p30
    %p32 = scmp.ne.s32.totalorder %s21, %s24
    %p33 = scmp.eq.s32.totalorder %s16, 1
    %p34 = por %p32, %p33
    %p35 = scmp.ne.s32.totalorder %s24, %s25
    %p36 = scmp.eq.s32.totalorder %s16, 0
    %p37 = por %p35, %p36
    %p38 = scmp.ne.s32.totalorder %s24, %s25
    %p39 = scmp.eq.s32.totalorder %s17, 1
    %p40 = por %p38, %p39
    %p42 = scmp.ne.s32.totalorder %s25, %s41
    %p43 = scmp.eq.s32.totalorder %s17, 0
    %p44 = por %p42, %p43
    %s46 = sadd.s32 %s45, 1
    %p49 = scmp.eq.s32.totalorder %s11, 1
    %p50 = scmp.ne.s32.totalorder %s45, %s47
    %p51 = scmp.eq.s32.totalorder %s11, 0
    %p52 = por %p50, %p51
    %p53 = scmp.ne.s32.totalorder %s45, %s47
    %p54 = scmp.eq.s32.totalorder %s16, 1
    %p55 = por %p53, %p54
    %p56 = scmp.ne.s32.totalorder %s47, %s48
    %p57 = scmp.eq.s32.totalorder %s16, 0
    %p58 = por %p56, %p57
    %p59 = scmp.ne.s32.totalorder %s47, %s48
    %p60 = scmp.eq.s32.totalorder %s17, 1
    %p61 = por %p59, %p60
    %p63 = scmp.ne.s32.totalorder %s48, %s62
    %p64 = scmp.eq.s32.totalorder %s17, 0
    %p65 = por %p63, %p64
    %s67 = sadd.s32 %s66, 1
    %p70 = scmp.eq.s32.totalorder %s11, 1
    %p71 = scmp.ne.s32.totalorder %s66, %s68
    %p72 = scmp.eq.s32.totalorder %s11, 0
    %p73 = por %p71, %p72
    %p74 = scmp.ne.s32.totalorder %s66, %s68
    %p75 = scmp.eq.s32.totalorder %s16, 1
    %p76 = por %p74, %p75
    %p77 = scmp.ne.s32.totalorder %s68, %s69
    %p78 = scmp.eq.s32.totalorder %s16, 0
    %p79 = por %p77, %p78
    %p80 = scmp.ne.s32.totalorder %s68, %s69
    %p81 = scmp.eq.s32.totalorder %s17, 1
    %p82 = por %p80, %p81
    %p84 = scmp.ne.s32.totalorder %s69, %s83
    %p85 = scmp.eq.s32.totalorder %s17, 0
    %p86 = por %p84, %p85
    %s88 = sadd.s32 %s87, 1
    %p91 = scmp.eq.s32.totalorder %s11, 1
    %p92 = scmp.ne.s32.totalorder %s87, %s89
    %p93 = scmp.eq.s32.totalorder %s11, 0
    %p94 = por %p92, %p93
    %p95 = scmp.ne.s32.totalorder %s87, %s89
    %p96 = scmp.eq.s32.totalorder %s16, 1
    %p97 = por %p95, %p96
    %p98 = scmp.ne.s32.totalorder %s89, %s90
    %p99 = scmp.eq.s32.totalorder %s16, 0
    %p100 = por %p98, %p99
    %p101 = scmp.ne.s32.totalorder %s89, %s90
    %p102 = scmp.eq.s32.totalorder %s17, 1
    %p103 = por %p101, %p102
    %p105 = scmp.ne.s32.totalorder %s90, %s104
    %p106 = scmp.eq.s32.totalorder %s17, 0
    %p107 = por %p105, %p106
    %s108 = ssub.s32 %s11, %s18
    %p109 = scmp.eq.s32.totalorder %s108, 0
    %s111 = sadd.s32 %s110, 1
    %s112 = scalar_select %p109, %s110, %s111
    %p115 = pneg %p109
    %p116 = scmp.eq.s32.totalorder %s11, 1
    %p117 = por %p115, %p116
    %p118 = scmp.ne.s32.totalorder %s110, %s113
    %p119 = scmp.eq.s32.totalorder %s11, 0
    %p120 = por %p118, %p119
    %p121 = scmp.ne.s32.totalorder %s110, %s113
    %p122 = scmp.eq.s32.totalorder %s16, 1
    %p123 = por %p121, %p122
    %p124 = scmp.ne.s32.totalorder %s113, %s114
    %p125 = scmp.eq.s32.totalorder %s16, 0
    %p126 = por %p124, %p125
    %p127 = scmp.ne.s32.totalorder %s113, %s114
    %p128 = scmp.eq.s32.totalorder %s17, 1
    %p129 = por %p127, %p128
    %p131 = scmp.ne.s32.totalorder %s114, %s130
    %p132 = scmp.eq.s32.totalorder %s17, 0
    %p133 = por %p131, %p132
    %s134 = ssub.s32 %s11, %s18
    %p135 = scmp.eq.s32.totalorder %s134, 0
    %s137 = sadd.s32 %s136, 1
    %s138 = scalar_select %p135, %s136, %s137
    %p141 = pneg %p135
    %p142 = scmp.eq.s32.totalorder %s11, 1
    %p143 = por %p141, %p142
    %p144 = scmp.ne.s32.totalorder %s136, %s139
    %p145 = scmp.eq.s32.totalorder %s11, 0
    %p146 = por %p144, %p145
    %p147 = scmp.ne.s32.totalorder %s136, %s139
    %p148 = scmp.eq.s32.totalorder %s16, 1
    %p149 = por %p147, %p148
    %p150 = scmp.ne.s32.totalorder %s139, %s140
    %p151 = scmp.eq.s32.totalorder %s16, 0
    %p152 = por %p150, %p151
    %p153 = scmp.ne.s32.totalorder %s139, %s140
    %p154 = scmp.eq.s32.totalorder %s17, 1
    %p155 = por %p153, %p154
    %p157 = scmp.ne.s32.totalorder %s140, %s156
    %p158 = scmp.eq.s32.totalorder %s17, 0
    %p159 = por %p157, %p158
    %p160 = scmp.le.s32.totalorder 1, %s11
    %p161 = scmp.lt.s32.totalorder %s11, 3
    %p162 = pnand %p160, %p161
    %p163 = pneg %p162
    // Predicated region
    $region9: #{conv2x_forward.2} parent=5 // pred_check
      _
    $region10: #{conv2x_forward.2} parent=5 // pred_check_branch
      %165 = sbr.rel (%p162) target = $region12
    $region11: #{conv2x_forward.2} parent=5 // pred_region
      %s166 = ssub.s32 %s11, 1
      // Predicated region
      $region13: #{conv2x_forward.2} parent=11 // pred_check
        %p167 = pneg %p58
      $region14: #{conv2x_forward.2} parent=11 // pred_check_branch
        %169 = sbr.rel (%p167) target = $region16
      $region15: #{conv2x_forward.2} parent=11 // pred_region
        _
      $region16: #{conv2x_forward.2} parent=11 // pred_fallthru
        _
      // Predicated region
      $region17: #{conv2x_forward.2} parent=11 // pred_check
        %p170 = pneg %p79
      $region18: #{conv2x_forward.2} parent=11 // pred_check_branch
        %172 = sbr.rel (%p170) target = $region20
      $region19: #{conv2x_forward.2} parent=11 // pred_region
        _
      $region20: #{conv2x_forward.2} parent=11 // pred_fallthru
        _
      // Predicated region
      $region21: #{conv2x_forward.2} parent=11 // pred_check
        %p173 = pneg %p100
      $region22: #{conv2x_forward.2} parent=11 // pred_check_branch
        %175 = sbr.rel (%p173) target = $region24
      $region23: #{conv2x_forward.2} parent=11 // pred_region
        _
      $region24: #{conv2x_forward.2} parent=11 // pred_fallthru
        _
    $region12: #{conv2x_forward.2} parent=5 // pred_fallthru
      _
    %p176 = scmp.lt.s32.totalorder %s11, 2
    // Predicated region
    $region25: #{conv2x_forward.2} parent=5 // pred_check
      %p177 = pneg %p176
    $region26: #{conv2x_forward.2} parent=5 // pred_check_branch
      %179 = sbr.rel (%p177) target = $region28
    $region27: #{conv2x_forward.2} parent=5 // pred_region
      // Predicated region
      $region29: #{conv2x_forward.2} parent=27 // pred_check
        %p180 = pneg %p31
      $region30: #{conv2x_forward.2} parent=27 // pred_check_branch
        %182 = sbr.rel (%p180) target = $region32
      $region31: #{conv2x_forward.2} parent=27 // pred_region
        %p183 = scmp.lt.s32.totalorder %s11, 1
        %s184 = scalar_select %p183, %s11, 1
        %s185 = smul.addr %s184, 4
        %s186 = smul.addr %s185, 4
        %s187 = scalar_lea.vmem %s0, %s186
      $region32: #{conv2x_forward.2} parent=27 // pred_fallthru
        _
      // Predicated region
      $region33: #{conv2x_forward.2} parent=27 // pred_check
        %p188 = pneg %p120
      $region34: #{conv2x_forward.2} parent=27 // pred_check_branch
        %190 = sbr.rel (%p188) target = $region36
      $region35: #{conv2x_forward.2} parent=27 // pred_region
        %p191 = scmp.lt.s32.totalorder %s11, 1
        %s192 = scalar_select %p191, %s11, 1
        %s193 = smul.addr %s192, 2
        %s194 = smul.addr %s193, 4
        %s195 = scalar_lea.vmem %s4, %s194
      $region36: #{conv2x_forward.2} parent=27 // pred_fallthru
        _
    $region28: #{conv2x_forward.2} parent=5 // pred_fallthru
      _
    %p196 = scmp.le.s32.totalorder 1, %s11
    %p197 = scmp.lt.s32.totalorder %s11, 3
    %p198 = pnand %p196, %p197
    %p199 = pneg %p198
    // Predicated region
    $region37: #{conv2x_forward.2} parent=5 // pred_check
      _
    $region38: #{conv2x_forward.2} parent=5 // pred_check_branch
      %201 = sbr.rel (%p198) target = $region40
    $region39: #{conv2x_forward.2} parent=5 // pred_region
      %s202 = ssub.s32 %s11, 1
      %p203 = scmp.lt.s32.totalorder %s16, 1
      %s204 = scalar_select %p203, %s16, 1
      %s205 = smul.addr %s204, 4
      %s206 = smul.addr %s205, 4
      %s207 = scalar_lea.vmem %s0, %s206
      %p208 = pneg %p37
      %p209 = pneg %p34
      %p210 = pneg %p58
      %p211 = pneg %p55
      %p212 = pneg %p79
      %p213 = pneg %p76
      %p214 = pneg %p100
      %p215 = pneg %p97
      %p216 = scmp.lt.s32.totalorder %s16, 1
      %s217 = scalar_select %p216, %s16, 1
      %s218 = smul.addr %s217, 2
      %s219 = smul.addr %s218, 4
      %s220 = scalar_lea.vmem %s4, %s219
      %p221 = pneg %p126
      %p222 = pneg %p123
      %p223 = pneg %p152
      %p224 = pneg %p149
      %p225 = scmp.lt.s32.totalorder %s16, 1
      %s226 = scalar_select %p225, %s16, 1
      %s227 = smul.addr %s226, 4
      %s228 = smul.addr %s227, 4
      %s229 = scalar_lea.vmem %s5, %s228
      %p230 = scmp.lt.s32.totalorder %s16, 1
      %s231 = scalar_select %p230, %s16, 1
      %s232 = smul.addr %s231, 4
      %s233 = smul.addr %s232, 4
      %s234 = scalar_lea.vmem %s0, %s233
      %p235 = scmp.lt.s32.totalorder %s16, 1
      %s236 = scalar_select %p235, %s16, 1
      %s237 = smul.addr %s236, 2
      %s238 = smul.addr %s237, 4
      %s239 = scalar_lea.vmem %s4, %s238
      %p240 = scmp.lt.s32.totalorder %s16, 1
      %s241 = scalar_select %p240, %s16, 1
      %s242 = smul.addr %s241, 4
      %s243 = smul.addr %s242, 4
      %s244 = scalar_lea.vmem %s5, %s243
      %v246 = vld [vmem:[%s234] sm:$0xf]
      %s247 = scalar_lea.vmem %s234, 8
      %v248 = vld [vmem:[%s247] sm:$0xf]
      %v249 = vld [vmem:[%s234 + $0x4] sm:$0x1]
      %v252 = vunpack.c.l.b16 %v246
      %v253 = vunpack.c.l.b16 %v249
      %v254 = vpack.c.b16 %v253, %v252
      %v256 = vshrl.u32 %v254, 16
      %v258 = vshll.u32 %v254, 16
      %v260 = vrot.slane %v258, 1
      %v261 = vor.u32 %v256, %v260
      %v263 = vld [vmem:[%s1] sm:$0xff]
      %v264 = vld [vmem:[%s1 + $0x8] sm:$0xff]
      %v265 = vld [vmem:[%s1 + $0x10] sm:$0xff]
      %v266 = vld [vmem:[%s1 + $0x18] sm:$0xff]
      %v267 = vld [vmem:[%s1 + $0x20] sm:$0xff]
      %v268 = vld [vmem:[%s1 + $0x28] sm:$0xff]
      %v269 = vld [vmem:[%s1 + $0x30] sm:$0xff]
      %v270 = vld [vmem:[%s1 + $0x38] sm:$0xff]
      %v271 = vld [vmem:[%s1 + $0x40] sm:$0xff]
      %v272 = vld [vmem:[%s1 + $0x48] sm:$0xff]
      %v273 = vld [vmem:[%s1 + $0x50] sm:$0xff]
      %v274 = vld [vmem:[%s1 + $0x58] sm:$0xff]
      %v275 = vld [vmem:[%s1 + $0x60] sm:$0xff]
      %v276 = vld [vmem:[%s1 + $0x68] sm:$0xff]
      %v277 = vld [vmem:[%s1 + $0x70] sm:$0xff]
      %v278 = vld [vmem:[%s1 + $0x78] sm:$0xff]
      %v279 = vld [vmem:[%s1 + $0x80] sm:$0xff]
      %v280 = vld [vmem:[%s1 + $0x88] sm:$0xff]
      %v281 = vld [vmem:[%s1 + $0x90] sm:$0xff]
      %v282 = vld [vmem:[%s1 + $0x98] sm:$0xff]
      %v283 = vld [vmem:[%s1 + $0xa0] sm:$0xff]
      %v284 = vld [vmem:[%s1 + $0xa8] sm:$0xff]
      %v285 = vld [vmem:[%s1 + $0xb0] sm:$0xff]
      %v286 = vld [vmem:[%s1 + $0xb8] sm:$0xff]
      %v287 = vld [vmem:[%s1 + $0xc0] sm:$0xff]
      %v288 = vld [vmem:[%s1 + $0xc8] sm:$0xff]
      %v289 = vld [vmem:[%s1 + $0xd0] sm:$0xff]
      %v290 = vld [vmem:[%s1 + $0xd8] sm:$0xff]
      %v291 = vld [vmem:[%s1 + $0xe0] sm:$0xff]
      %v292 = vld [vmem:[%s1 + $0xe8] sm:$0xff]
      %v293 = vld [vmem:[%s1 + $0xf0] sm:$0xff]
      %v294 = vld [vmem:[%s1 + $0xf8] sm:$0xff]
      %v295 = vld [vmem:[%s1 + $0x100] sm:$0xff]
      %v296 = vld [vmem:[%s1 + $0x108] sm:$0xff]
      %v297 = vld [vmem:[%s1 + $0x110] sm:$0xff]
      %v298 = vld [vmem:[%s1 + $0x118] sm:$0xff]
      %v299 = vld [vmem:[%s1 + $0x120] sm:$0xff]
      %v300 = vld [vmem:[%s1 + $0x128] sm:$0xff]
      %v301 = vld [vmem:[%s1 + $0x130] sm:$0xff]
      %v302 = vld [vmem:[%s1 + $0x138] sm:$0xff]
      %v303 = vld [vmem:[%s1 + $0x140] sm:$0xff]
      %v304 = vld [vmem:[%s1 + $0x148] sm:$0xff]
      %v305 = vld [vmem:[%s1 + $0x150] sm:$0xff]
      %v306 = vld [vmem:[%s1 + $0x158] sm:$0xff]
      %v307 = vld [vmem:[%s1 + $0x160] sm:$0xff]
      %v308 = vld [vmem:[%s1 + $0x168] sm:$0xff]
      %v309 = vld [vmem:[%s1 + $0x170] sm:$0xff]
      %v310 = vld [vmem:[%s1 + $0x178] sm:$0xff]
      %v359 = vunpack.c.l.b16 %v263
      %v360 = vunpack.c.h.b16 %v263
      %v361 = vunpack.c.l.b16 %v264
      %v362 = vunpack.c.h.b16 %v264
      %v363 = vunpack.c.l.b16 %v265
      %v364 = vunpack.c.h.b16 %v265
      %v365 = vunpack.c.l.b16 %v266
      %v366 = vunpack.c.h.b16 %v266
      %v367 = vunpack.c.l.b16 %v267
      %v368 = vunpack.c.h.b16 %v267
      %v369 = vunpack.c.l.b16 %v268
      %v370 = vunpack.c.h.b16 %v268
      %v371 = vunpack.c.l.b16 %v269
      %v372 = vunpack.c.h.b16 %v269
      %v373 = vunpack.c.l.b16 %v270
      %v374 = vunpack.c.h.b16 %v270
      %v375 = vunpack.c.l.b16 %v271
      %v376 = vunpack.c.h.b16 %v271
      %v377 = vunpack.c.l.b16 %v272
      %v378 = vunpack.c.h.b16 %v272
      %v379 = vunpack.c.l.b16 %v273
      %v380 = vunpack.c.h.b16 %v273
      %v381 = vunpack.c.l.b16 %v274
      %v382 = vunpack.c.h.b16 %v274
      %v383 = vunpack.c.l.b16 %v275
      %v384 = vunpack.c.h.b16 %v275
      %v385 = vunpack.c.l.b16 %v276
      %v386 = vunpack.c.h.b16 %v276
      %v387 = vunpack.c.l.b16 %v277
      %v388 = vunpack.c.h.b16 %v277
      %v389 = vunpack.c.l.b16 %v278
      %v390 = vunpack.c.h.b16 %v278
      %v391 = vunpack.c.l.b16 %v279
      %v392 = vunpack.c.h.b16 %v279
      %v393 = vunpack.c.l.b16 %v280
      %v394 = vunpack.c.h.b16 %v280
      %v395 = vunpack.c.l.b16 %v281
      %v396 = vunpack.c.h.b16 %v281
      %v397 = vunpack.c.l.b16 %v282
      %v398 = vunpack.c.h.b16 %v282
      %v399 = vunpack.c.l.b16 %v283
      %v400 = vunpack.c.h.b16 %v283
      %v401 = vunpack.c.l.b16 %v284
      %v402 = vunpack.c.h.b16 %v284
      %v403 = vunpack.c.l.b16 %v285
      %v404 = vunpack.c.h.b16 %v285
      %v405 = vunpack.c.l.b16 %v286
      %v406 = vunpack.c.h.b16 %v286
      %v407 = vunpack.c.l.b16 %v287
      %v408 = vunpack.c.h.b16 %v287
      %v409 = vunpack.c.l.b16 %v288
      %v410 = vunpack.c.h.b16 %v288
      %v411 = vunpack.c.l.b16 %v289
      %v412 = vunpack.c.h.b16 %v289
      %v413 = vunpack.c.l.b16 %v290
      %v414 = vunpack.c.h.b16 %v290
      %v415 = vunpack.c.l.b16 %v291
      %v416 = vunpack.c.h.b16 %v291
      %v417 = vunpack.c.l.b16 %v292
      %v418 = vunpack.c.h.b16 %v292
      %v419 = vunpack.c.l.b16 %v293
      %v420 = vunpack.c.h.b16 %v293
      %v421 = vunpack.c.l.b16 %v294
      %v422 = vunpack.c.h.b16 %v294
      %v423 = vunpack.c.l.b16 %v295
      %v424 = vunpack.c.h.b16 %v295
      %v425 = vunpack.c.l.b16 %v296
      %v426 = vunpack.c.h.b16 %v296
      %v427 = vunpack.c.l.b16 %v297
      %v428 = vunpack.c.h.b16 %v297
      %v429 = vunpack.c.l.b16 %v298
      %v430 = vunpack.c.h.b16 %v298
      %v431 = vunpack.c.l.b16 %v299
      %v432 = vunpack.c.h.b16 %v299
      %v433 = vunpack.c.l.b16 %v300
      %v434 = vunpack.c.h.b16 %v300
      %v435 = vunpack.c.l.b16 %v301
      %v436 = vunpack.c.h.b16 %v301
      %v437 = vunpack.c.l.b16 %v302
      %v438 = vunpack.c.h.b16 %v302
      %v439 = vunpack.c.l.b16 %v303
      %v440 = vunpack.c.h.b16 %v303
      %v441 = vunpack.c.l.b16 %v304
      %v442 = vunpack.c.h.b16 %v304
      %v443 = vunpack.c.l.b16 %v305
      %v444 = vunpack.c.h.b16 %v305
      %v445 = vunpack.c.l.b16 %v306
      %v446 = vunpack.c.h.b16 %v306
      %v447 = vunpack.c.l.b16 %v307
      %v448 = vunpack.c.h.b16 %v307
      %v449 = vunpack.c.l.b16 %v308
      %v450 = vunpack.c.h.b16 %v308
      %v451 = vunpack.c.l.b16 %v309
      %v452 = vunpack.c.h.b16 %v309
      %v453 = vunpack.c.l.b16 %v310
      %v454 = vunpack.c.h.b16 %v310
      %v455 = vpack.c.b16 %v361, %v359
      %v456 = vpack.c.b16 %v362, %v360
      %v457 = vpack.c.b16 %v365, %v363
      %v458 = vpack.c.b16 %v366, %v364
      %v459 = vpack.c.b16 %v369, %v367
      %v460 = vpack.c.b16 %v370, %v368
      %v461 = vpack.c.b16 %v373, %v371
      %v462 = vpack.c.b16 %v374, %v372
      %v463 = vpack.c.b16 %v377, %v375
      %v464 = vpack.c.b16 %v378, %v376
      %v465 = vpack.c.b16 %v381, %v379
      %v466 = vpack.c.b16 %v382, %v380
      %v467 = vpack.c.b16 %v385, %v383
      %v468 = vpack.c.b16 %v386, %v384
      %v469 = vpack.c.b16 %v389, %v387
      %v470 = vpack.c.b16 %v390, %v388
      %v471 = vpack.c.b16 %v393, %v391
      %v472 = vpack.c.b16 %v394, %v392
      %v473 = vpack.c.b16 %v397, %v395
      %v474 = vpack.c.b16 %v398, %v396
      %v475 = vpack.c.b16 %v401, %v399
      %v476 = vpack.c.b16 %v402, %v400
      %v477 = vpack.c.b16 %v405, %v403
      %v478 = vpack.c.b16 %v406, %v404
      %v479 = vpack.c.b16 %v409, %v407
      %v480 = vpack.c.b16 %v410, %v408
      %v481 = vpack.c.b16 %v413, %v411
      %v482 = vpack.c.b16 %v414, %v412
      %v483 = vpack.c.b16 %v417, %v415
      %v484 = vpack.c.b16 %v418, %v416
      %v485 = vpack.c.b16 %v421, %v419
      %v486 = vpack.c.b16 %v422, %v420
      %v487 = vpack.c.b16 %v425, %v423
      %v488 = vpack.c.b16 %v426, %v424
      %v489 = vpack.c.b16 %v429, %v427
      %v490 = vpack.c.b16 %v430, %v428
      %v491 = vpack.c.b16 %v433, %v431
      %v492 = vpack.c.b16 %v434, %v432
      %v493 = vpack.c.b16 %v437, %v435
      %v494 = vpack.c.b16 %v438, %v436
      %v495 = vpack.c.b16 %v441, %v439
      %v496 = vpack.c.b16 %v442, %v440
      %v497 = vpack.c.b16 %v445, %v443
      %v498 = vpack.c.b16 %v446, %v444
      %v499 = vpack.c.b16 %v449, %v447
      %v500 = vpack.c.b16 %v450, %v448
      %v501 = vpack.c.b16 %v453, %v451
      %v502 = vpack.c.b16 %v454, %v452
      %551 = vmatprep.subr.bf16.mxu0 %v456
      %552 = vmatpush1.bf16.msra.mxu0 %v455
      %553 = vmatprep.subr.bf16.mxu0 %v458
      %554 = vmatpush1.bf16.msra.mxu0 %v457
      %555 = vmatprep.subr.bf16.mxu0 %v460
      %556 = vmatpush1.bf16.msra.mxu0 %v459
      %557 = vmatprep.subr.bf16.mxu0 %v462
      %558 = vmatpush1.bf16.msra.mxu0 %v461
      %559 = vmatprep.subr.bf16.mxu0 %v464
      %560 = vmatpush1.bf16.msra.mxu0 %v463
      %561 = vmatprep.subr.bf16.mxu0 %v466
      %562 = vmatpush1.bf16.msra.mxu0 %v465
      %563 = vmatprep.subr.bf16.mxu0 %v468
      %564 = vmatpush1.bf16.msra.mxu0 %v467
      %565 = vmatprep.subr.bf16.mxu0 %v470
      %566 = vmatpush1.bf16.msra.mxu0 %v469
      %567 = vmatprep.subr.bf16.mxu0 %v472
      %568 = vmatpush1.bf16.msra.mxu0 %v471
      %569 = vmatprep.subr.bf16.mxu0 %v474
      %570 = vmatpush1.bf16.msra.mxu0 %v473
      %571 = vmatprep.subr.bf16.mxu0 %v476
      %572 = vmatpush1.bf16.msra.mxu0 %v475
      %573 = vmatprep.subr.bf16.mxu0 %v478
      %574 = vmatpush1.bf16.msra.mxu0 %v477
      %575 = vmatprep.subr.bf16.mxu0 %v480
      %576 = vmatpush1.bf16.msra.mxu0 %v479
      %577 = vmatprep.subr.bf16.mxu0 %v482
      %578 = vmatpush1.bf16.msra.mxu0 %v481
      %579 = vmatprep.subr.bf16.mxu0 %v484
      %580 = vmatpush1.bf16.msra.mxu0 %v483
      %581 = vmatprep.subr.bf16.mxu0 %v486
      %582 = vmatpush1.bf16.msra.mxu0 %v485
      %583 = vmatprep.mubr.bf16.mxu0 %v248
      %584 = vmatmul.mubr.bf16.gmra.mrb[0].mxu0 %v246
      %v585 = vpop.f32.mrb[0].mxu0
      %v586 = vadd.f32 0.0, %v585
      %v587 = vpop.f32.mrb[0].mxu0
      %v588 = vadd.f32 0.0, %v587
      %v589 = vpop.f32.mrb[0].mxu0
      %v590 = vpop.f32.mrb[0].mxu0
      %591 = vdwg.mxu0
      %592 = vmatprep.subr.bf16.mxu0 %v488
      %593 = vmatpush1.bf16.msra.mxu0 %v487
      %594 = vmatprep.subr.bf16.mxu0 %v490
      %595 = vmatpush1.bf16.msra.mxu0 %v489
      %596 = vmatprep.subr.bf16.mxu0 %v492
      %597 = vmatpush1.bf16.msra.mxu0 %v491
      %598 = vmatprep.subr.bf16.mxu0 %v494
      %599 = vmatpush1.bf16.msra.mxu0 %v493
      %600 = vmatprep.subr.bf16.mxu0 %v496
      %601 = vmatpush1.bf16.msra.mxu0 %v495
      %602 = vmatprep.subr.bf16.mxu0 %v498
      %603 = vmatpush1.bf16.msra.mxu0 %v497
      %604 = vmatprep.subr.bf16.mxu0 %v500
      %605 = vmatpush1.bf16.msra.mxu0 %v499
      %606 = vmatprep.subr.bf16.mxu0 %v502
      %607 = vmatpush1.bf16.msra.mxu0 %v501
      %608 = vmatprep.subr.bf16.mxu0 0
      %609 = vmatpush1.bf16.msra.mxu0 0
      %610 = vmatprep.subr.bf16.mxu0 0
      %611 = vmatpush1.bf16.msra.mxu0 0
      %612 = vmatprep.subr.bf16.mxu0 0
      %613 = vmatpush1.bf16.msra.mxu0 0
      %614 = vmatprep.subr.bf16.mxu0 0
      %615 = vmatpush1.bf16.msra.mxu0 0
      %616 = vmatprep.subr.bf16.mxu0 0
      %617 = vmatpush1.bf16.msra.mxu0 0
      %618 = vmatprep.subr.bf16.mxu0 0
      %619 = vmatpush1.bf16.msra.mxu0 0
      %620 = vmatprep.subr.bf16.mxu0 0
      %621 = vmatpush1.bf16.msra.mxu0 0
      %622 = vmatprep.subr.bf16.mxu0 0
      %623 = vmatpush1.bf16.msra.mxu0 0
      %624 = vmatprep.mubr.bf16.mxu0 0
      %625 = vmatmul.mubr.bf16.gmra.mrb[0].mxu0 %v261
      %v626 = vpop.f32.mrb[0].mxu0
      %v627 = vadd.f32 %v586, %v626
      %v628 = vpop.f32.mrb[0].mxu0
      %v629 = vadd.f32 %v588, %v628
      %v630 = vpop.f32.mrb[0].mxu0
      %v631 = vpop.f32.mrb[0].mxu0
      %632 = vdwg.mxu0
      %v633 = vld [vmem:[%s2] sm:$0x3]
      %v635 = vlaneseq
      %v636 = vshrl.u32 %v635, 7
      %v637 = vsub.s32 0, %v636
      %v638 = vrot.slane %v633, %v637
      %v639 = vlaneseq
      %v640 = vshrl.u32 %v639, 7
      %v641 = vsub.s32 1, %v640
      %v642 = vrot.slane %v633, %v641
      %v645 = vmul.f32 %v627, %v638
      %v646 = vmul.f32 %v629, %v642
      %v647 = vld [vmem:[%s3] sm:$0x3]
      %v649 = vlaneseq
      %v650 = vshrl.u32 %v649, 7
      %v651 = vsub.s32 0, %v650
      %v652 = vrot.slane %v647, %v651
      %v653 = vlaneseq
      %v654 = vshrl.u32 %v653, 7
      %v655 = vsub.s32 1, %v654
      %v656 = vrot.slane %v647, %v655
      %v659 = vadd.f32 %v645, %v652
      %v660 = vadd.f32 %v646, %v656
      %vm661 = vcmp.ge.f32.partialorder %v659, 0.0
      %vm662 = vcmp.ge.f32.partialorder %v660, 0.0
      %v663 = vmul.f32 %v659, 0.01
      %v664 = vmul.f32 %v660, 0.01
      %v665 = vsel %vm661, %v659, %v663
      %v666 = vsel %vm662, %v660, %v664
      %v667 = vld [vmem:[%s239] sm:$0xff]
      %v668 = vunpack.c.l.bf16 %v667
      %v669 = vunpack.c.h.bf16 %v667
      %v670 = vadd.f32 %v665, %v668
      %v671 = vadd.f32 %v666, %v669
      %vm672 = vcmask 1040384
      %vm673 = vsmask.f32 256
      %vm674 = vmand %vm672, %vm673
      %vm675 = vcmask 258052
      %vm676 = vsmask.f32 4352
      %vm677 = vmand %vm675, %vm676
      %vm678 = vmor %vm677, %vm674
      %v679 = vld [vmem:[%s244] sm:$0x11]
      %v680 = vsel %vm678, 0, %v679
      %681 = vst [vmem:[%s244] sm:$0x11] %v680
      %vm682 = vsmask.f32 7938
      %vm683 = vmand %vm672, %vm682
      %vm684 = vsmask.f32 7954
      %vm685 = vmand %vm675, %vm684
      %vm686 = vmor %vm685, %vm683
      %v687 = vld [vmem:[%s244 + $0x8] sm:$0x11]
      %v688 = vsel %vm686, 0, %v687
      %689 = vst [vmem:[%s244 + $0x8] sm:$0x11] %v688
      %v690 = vpack.c.bf16 %v670, %v670
      %v691 = vpack.c.bf16 %v671, %v671
      %v694 = vunpack.c.l.b16 %v690
      %v695 = vunpack.c.l.b16 %v691
      %v696 = vpack.c.b16 %v695, %v694
      %v698 = vshrl.u32 %v696, 16
      %v700 = vrot.slane %v698, 7
      %v701 = vshll.u32 %v696, 16
      %v703 = vor.u32 %v700, %v701
      %v704 = vrot.slane %v700, 4
      %vm707 = vcmask 1043456
      %vm708 = vmand %vm707, %vm682
      %vm709 = vcmask 261124
      %vm710 = vmand %vm709, %vm684
      %vm711 = vmor %vm710, %vm708
      %v712 = vld [vmem:[%s244] sm:$0xff]
      %v713 = vsel %vm711, %v703, %v712
      %714 = vst [vmem:[%s244] sm:$0xff] %v713
      %v715 = vld [vmem:[%s244 + $0x8] sm:$0x11]
      %v716 = vsel %vm678, %v704, %v715
      %717 = vst [vmem:[%s244 + $0x8] sm:$0x11] %v716
      %p718 = scmp.lt.s32.totalorder %s16, 1
      %s719 = scalar_select %p718, %s16, 1
      %s720 = smul.addr %s719, 4
      %s721 = smul.addr %s720, 4
      %s722 = scalar_lea.vmem %s5, %s721
      // Predicated region
      $region41: #{conv2x_forward.2} parent=39 // pred_check
        %p723 = pneg %p149
      $region42: #{conv2x_forward.2} parent=39 // pred_check_branch
        %725 = sbr.rel (%p723) target = $region44
      $region43: #{conv2x_forward.2} parent=39 // pred_region
        _
      $region44: #{conv2x_forward.2} parent=39 // pred_fallthru
        _
    $region40: #{conv2x_forward.2} parent=5 // pred_fallthru
      _
    %p726 = scmp.le.s32.totalorder 2, %s11
    // Predicated region
    $region45: #{conv2x_forward.2} parent=5 // pred_check
      %p727 = pneg %p726
    $region46: #{conv2x_forward.2} parent=5 // pred_check_branch
      %729 = sbr.rel (%p727) target = $region48
    $region47: #{conv2x_forward.2} parent=5 // pred_region
      %s730 = ssub.s32 %s11, 2
      // Predicated region
      $region49: #{conv2x_forward.2} parent=47 // pred_check
        %p731 = pneg %p155
      $region50: #{conv2x_forward.2} parent=47 // pred_check_branch
        %733 = sbr.rel (%p731) target = $region52
      $region51: #{conv2x_forward.2} parent=47 // pred_region
        %p734 = scmp.lt.s32.totalorder %s17, 1
        %s735 = scalar_select %p734, %s17, 1
        %s736 = smul.addr %s735, 4
        %s737 = smul.addr %s736, 4
        %s738 = scalar_lea.vmem %s5, %s737
      $region52: #{conv2x_forward.2} parent=47 // pred_fallthru
        _
    $region48: #{conv2x_forward.2} parent=5 // pred_fallthru
      _
  $region6: #{conv2x_forward.2} parent=0 // loop_footer
    %s15 = sadd.s32 1, %s11
  $region7: #{conv2x_forward.2} parent=0 // loop_footer_branch
    %10 = sbr.rel target = $region3
  $region8: #{conv2x_forward.2} parent=0 // loop_exit
    _

</llo_original>
